<compile_context>
chip_gen: v7x
topology: tpu7x:2x2x1
jax: 0.10.0
libtpu: 0.0.40
codegen_flags: <defaults>
</compile_context>

<pallas_src>
import jax
import jax.numpy as jnp
from jax.experimental import pallas as pl
from jax.experimental.pallas import tpu as pltpu

BN_EPS = 1e-5


def _make_fused_kernel(N, H, W, C_in, C_out):
    """Build the fused two-stage ConvBlock kernel with static shape constants."""
    WCout = W * C_out
    NROWS = N * H
    INV_ROWS = 1.0 / float(NROWS)

    def _conv_bn_relu(pad_ref, wband_ref, gamma, beta, pmat, C):
        """One ConvBlock: 3x3 conv (3 banded matmuls) + BatchNorm(batch stats) + ReLU.

        pad_ref   : (N, H+2, W*C) bf16   H-padded activation, lanes = (w, c)
        wband_ref : (3, W*C, W*C_out) bf16  per-row-tap banded conv weights
        gamma/beta: (1, W*C_out) f32     BN affine, replicated over w
        pmat      : (W*C_out, W*C_out) f32  per-channel mean-over-w projector
        returns   : (N*H, W*C_out) f32
        """
        WC = W * C
        # 3 row-tap matmuls (bf16 x bf16 -> f32 accumulate). The banded weights
        # fold the kw taps and the W-direction zero padding, so each operand is
        # just a lane-aligned h-shifted slice of the padded activation.
        acc = jnp.dot(pad_ref[:, 0:H, :].reshape(NROWS, WC), wband_ref[0],
                      preferred_element_type=jnp.float32)
        acc = acc + jnp.dot(pad_ref[:, 1:H + 1, :].reshape(NROWS, WC), wband_ref[1],
                            preferred_element_type=jnp.float32)
        acc = acc + jnp.dot(pad_ref[:, 2:H + 2, :].reshape(NROWS, WC), wband_ref[2],
                            preferred_element_type=jnp.float32)

        # BatchNorm2d, training-mode batch statistics over (N, H, W), all f32.
        # Reduce over rows first, then project over the w column groups with a
        # tiny (1, WCout) x (WCout, WCout) matmul (pmat already divides by W).
        # var via E[x^2] - mean^2: one pass over acc, short dependency chain
        # (mild f32 cancellation risk is acceptable for BN-scale activations).
        s1 = jnp.sum(acc, axis=0, keepdims=True)              # (1, WCout)
        s2 = jnp.sum(acc * acc, axis=0, keepdims=True)        # (1, WCout)
        mean = jnp.dot(s1, pmat, preferred_element_type=jnp.float32) * INV_ROWS
        ex2 = jnp.dot(s2, pmat, preferred_element_type=jnp.float32) * INV_ROWS
        var = ex2 - mean * mean                                # biased (PyTorch fwd)
        scale = gamma * jax.lax.rsqrt(var + BN_EPS)
        y = acc * scale + (beta - mean * scale)
        return jnp.maximum(y, 0.0)                             # act == 'relu'

    def kernel(x_ref, w1_ref, g1_ref, b1_ref, w2_ref, g2_ref, b2_ref, p_ref,
               out_ref, pad1_ref, pad2_ref):
        pmat = p_ref[...]
        WCin = W * C_in

        # ---- stage 1: ConvBlock(C_in -> C_out) ----
        # Zero only the two H-halo rows; interior written once, lane-aligned.
        pad1_ref[:, 0:1, :] = jnp.zeros((N, 1, WCin), dtype=pad1_ref.dtype)
        pad1_ref[:, H + 1:H + 2, :] = jnp.zeros((N, 1, WCin), dtype=pad1_ref.dtype)
        pad1_ref[:, 1:H + 1, :] = x_ref[...]
        y1 = _conv_bn_relu(pad1_ref, w1_ref, g1_ref[...], b1_ref[...], pmat, C_in)

        # ---- stage 2: ConvBlock(C_out -> C_out); y1 never leaves VMEM ----
        pad2_ref[:, 0:1, :] = jnp.zeros((N, 1, WCout), dtype=pad2_ref.dtype)
        pad2_ref[:, H + 1:H + 2, :] = jnp.zeros((N, 1, WCout), dtype=pad2_ref.dtype)
        pad2_ref[:, 1:H + 1, :] = y1.reshape(N, H, WCout).astype(pad2_ref.dtype)
        y2 = _conv_bn_relu(pad2_ref, w2_ref, g2_ref[...], b2_ref[...], pmat, C_out)

        out_ref[...] = y2                 # (N*H, W*C_out) f32: full-lane stores

    return kernel


def _w_band_taps(w_hwio, W):
    """(3,3,Cin,Cout) -> (3, W*Cin, W*Cout) per-row-tap banded matmul weights.

    For row tap dy, band[w_in*Cin+c, w_out*Cout+co] = weight[dy, dx, c, co]
    with dx = w_in - w_out + 1 (dx in {0,1,2}); out-of-range w indices are
    simply absent, which reproduces the conv's zero padding along W.
    """
    kh, kw, cin, cout = w_hwio.shape
    taps = []
    for dy in range(kh):
        parts = []
        for dx in range(kw):
            band = jnp.eye(W, W, k=1 - dx, dtype=w_hwio.dtype)   # [w_in, w_out]
            parts.append(band[:, None, :, None] *
                         w_hwio[dy, dx][None, :, None, :])       # (W,Cin,W,Cout)
        taps.append(sum(parts).reshape(W * cin, W * cout))
    return jnp.stack(taps, axis=0)


def double_nested_conv(x_nchw, params):
    """Forward pass of DoubleNestedConv. Input/output NCHW f32 like PyTorch."""
    N, C_in, H, W = x_nchw.shape
    C_out = params["w1"].shape[-1]
    WCout = W * C_out

    # ---- wrapper-side layout plumbing only (no compute hoisted) ----
    x2d = jnp.transpose(x_nchw, (0, 2, 3, 1)).reshape(N, H, W * C_in)
    x2d = x2d.astype(jnp.bfloat16)
    wband1 = _w_band_taps(params["w1"].astype(jnp.float32), W).astype(jnp.bfloat16)
    wband2 = _w_band_taps(params["w2"].astype(jnp.float32), W).astype(jnp.bfloat16)
    g1c = jnp.tile(params["g1"].astype(jnp.float32), W).reshape(1, WCout)
    b1c = jnp.tile(params["be1"].astype(jnp.float32), W).reshape(1, WCout)
    g2c = jnp.tile(params["g2"].astype(jnp.float32), W).reshape(1, WCout)
    b2c = jnp.tile(params["be2"].astype(jnp.float32), W).reshape(1, WCout)
    # Per-channel mean over the W column groups, re-broadcast to all columns.
    pmat = jnp.tile(jnp.eye(C_out, dtype=jnp.float32), (W, W)) / W

    # Size the scoped-VMEM budget from actual residency (x4 headroom for
    # double-buffering / compiler temporaries), capped below v7x's 64 MiB.
    resident_bytes = (
        x2d.size * 2 + wband1.size * 2 + wband2.size * 2
        + (g1c.size + b1c.size + g2c.size + b2c.size + pmat.size) * 4
        + N * (H + 2) * (W * C_in + WCout) * 2      # pad scratch (bf16)
        + N * H * WCout * 4)                        # f32 output
    vmem_limit = int(min(48 * 2**20, max(4 * resident_bytes, 16 * 2**20)))

    kernel = _make_fused_kernel(N, H, W, C_in, C_out)
    vmem = pl.BlockSpec(memory_space=pltpu.MemorySpace.VMEM)
    out2d = pl.pallas_call(
        kernel,
        out_shape=jax.ShapeDtypeStruct((N * H, WCout), jnp.float32),
        in_specs=[vmem] * 8,
        out_specs=vmem,
        scratch_shapes=[
            pltpu.VMEM((N, H + 2, W * C_in), jnp.bfloat16),   # H-padded stage-1 act
            pltpu.VMEM((N, H + 2, WCout), jnp.bfloat16),      # H-padded stage-2 act
        ],
        compiler_params=pltpu.CompilerParams(vmem_limit_bytes=vmem_limit),
    )(x2d, wband1, g1c, b1c, wband2, g2c, b2c, pmat)

    # (N*H, W*C_out) -> (N, H, W, C_out) -> NCHW.
    # (Could emit bf16 / NHWC directly if the consumer tolerates it.)
    return jnp.transpose(out2d.reshape(N, H, W, C_out), (0, 3, 1, 2))


def init_params(key, middle_channels, out_channels):
    """Synthetic parameters (shapes match nn.Conv2d / nn.BatchNorm2d).

    The Conv2d bias is omitted on purpose: a per-channel constant added before
    training-mode BatchNorm is exactly removed by the mean subtraction.
    """
    k1, k2, k3, k4 = jax.random.split(key, 4)
    w1_oihw = 0.1 * jax.random.normal(k1, (out_channels, middle_channels, 3, 3), jnp.float32)
    w2_oihw = 0.1 * jax.random.normal(k2, (out_channels, out_channels, 3, 3), jnp.float32)
    return {
        "w1": jnp.transpose(w1_oihw, (2, 3, 1, 0)),   # HWIO (3,3,Cin,Cout)
        "g1": 1.0 + 0.1 * jax.random.normal(k3, (out_channels,), jnp.float32),
        "be1": 0.1 * jax.random.normal(k4, (out_channels,), jnp.float32),
        "w2": jnp.transpose(w2_oihw, (2, 3, 1, 0)),
        "g2": jnp.ones((out_channels,), jnp.float32),
        "be2": jnp.zeros((out_channels,), jnp.float32),
    }


def _reference(x_nchw, params):
    """Pure-JAX reference matching the kernel's bf16 quantization points."""
    def q(a):  # mimic the kernel's bf16 cast of conv operands
        return a.astype(jnp.bfloat16).astype(jnp.float32)

    def block(x_nhwc, w, g, b):
        y = jax.lax.conv_general_dilated(
            q(x_nhwc), q(w), window_strides=(1, 1), padding=((1, 1), (1, 1)),
            dimension_numbers=("NHWC", "HWIO", "NHWC"))
        m = jnp.mean(y, axis=(0, 1, 2))
        v = jnp.mean((y - m) ** 2, axis=(0, 1, 2))
        y = (y - m) * (g * jax.lax.rsqrt(v + BN_EPS)) + b
        return jnp.maximum(y, 0.0)

    x = jnp.transpose(x_nchw, (0, 2, 3, 1))
    y1 = block(x, params["w1"], params["g1"], params["be1"])
    y2 = block(y1, params["w2"], params["g2"], params["be2"])
    return jnp.transpose(y2, (0, 3, 1, 2))


if __name__ == "__main__":
    # DoubleNestedConv(in_channels=4, middle_channels=4, out_channels=8, act='relu')
    # Its forward consumes a tensor with `middle_channels` channels.
    N, C_MID, C_OUT, H, W = 2, 4, 8, 16, 16

    key = jax.random.PRNGKey(0)
    kx, kp = jax.random.split(key)
    x = jax.random.normal(kx, (N, C_MID, H, W), jnp.float32)   # NCHW like PyTorch
    params = init_params(kp, C_MID, C_OUT)

    fwd = jax.jit(double_nested_conv)
    out = jax.block_until_ready(fwd(x, params))
    assert out.shape == (N, C_OUT, H, W), out.shape

    ref = _reference(x, params)
    max_err = float(jnp.max(jnp.abs(out - ref)))
    assert max_err < 2e-2, f"max abs err vs reference: {max_err}"
    print("KERNEL_OK")
</pallas_src>

<mosaic_0001>
module attributes {stable_mosaic.version = 11 : i64} {
  func.func @kernel(%arg0: memref<2x16x64xbf16, #tpu.memory_space<vmem>>, %arg1: memref<3x64x128xbf16, #tpu.memory_space<vmem>>, %arg2: memref<1x128xf32, #tpu.memory_space<vmem>>, %arg3: memref<1x128xf32, #tpu.memory_space<vmem>>, %arg4: memref<3x128x128xbf16, #tpu.memory_space<vmem>>, %arg5: memref<1x128xf32, #tpu.memory_space<vmem>>, %arg6: memref<1x128xf32, #tpu.memory_space<vmem>>, %arg7: memref<128x128xf32, #tpu.memory_space<vmem>>, %arg8: memref<32x128xf32, #tpu.memory_space<vmem>>, %arg9: memref<2x18x64xbf16, #tpu.memory_space<vmem>>, %arg10: memref<2x18x128xbf16, #tpu.memory_space<vmem>>) attributes {dimension_semantics = [], scalar_prefetch = 0 : i64, scratch_operands = 2 : i64, tpu.core_type = #tpu.core_type<tc>} {
    %c0 = arith.constant 0 : index
    %c0_0 = arith.constant 0 : index
    %0 = vector.load %arg7[%c0, %c0_0] : memref<128x128xf32, #tpu.memory_space<vmem>>, vector<128x128xf32>
    %cst = arith.constant 0.000000e+00 : bf16
    %1 = vector.broadcast %cst : bf16 to vector<2x1x64xbf16>
    %c0_1 = arith.constant 0 : index
    %c0_2 = arith.constant 0 : index
    %c0_3 = arith.constant 0 : index
    %2 = vector.load %arg9[%c0_1, %c0_2, %c0_3] : memref<2x18x64xbf16, #tpu.memory_space<vmem>>, vector<2x1x64xbf16>
    tpu.vector_store %arg9[%c0_1, %c0_2, %c0_3], %1 {strides = array<i32>} : memref<2x18x64xbf16, #tpu.memory_space<vmem>>, vector<2x1x64xbf16>,
    %cst_4 = arith.constant 0.000000e+00 : bf16
    %3 = vector.broadcast %cst_4 : bf16 to vector<2x1x64xbf16>
    %c0_5 = arith.constant 0 : index
    %c17 = arith.constant 17 : index
    %c0_6 = arith.constant 0 : index
    %4 = vector.load %arg9[%c0_5, %c17, %c0_6] : memref<2x18x64xbf16, #tpu.memory_space<vmem>>, vector<2x1x64xbf16>
    tpu.vector_store %arg9[%c0_5, %c17, %c0_6], %3 {strides = array<i32>} : memref<2x18x64xbf16, #tpu.memory_space<vmem>>, vector<2x1x64xbf16>,
    %c0_7 = arith.constant 0 : index
    %c0_8 = arith.constant 0 : index
    %c0_9 = arith.constant 0 : index
    %5 = vector.load %arg0[%c0_7, %c0_8, %c0_9] : memref<2x16x64xbf16, #tpu.memory_space<vmem>>, vector<2x16x64xbf16>
    %c0_10 = arith.constant 0 : index
    %c1 = arith.constant 1 : index
    %c0_11 = arith.constant 0 : index
    %6 = vector.load %arg9[%c0_10, %c1, %c0_11] : memref<2x18x64xbf16, #tpu.memory_space<vmem>>, vector<2x16x64xbf16>
    tpu.vector_store %arg9[%c0_10, %c1, %c0_11], %5 {strides = array<i32>} : memref<2x18x64xbf16, #tpu.memory_space<vmem>>, vector<2x16x64xbf16>,
    %c0_12 = arith.constant 0 : index
    %c0_13 = arith.constant 0 : index
    %7 = vector.load %arg2[%c0_12, %c0_13] : memref<1x128xf32, #tpu.memory_space<vmem>>, vector<1x128xf32>
    %c0_14 = arith.constant 0 : index
    %c0_15 = arith.constant 0 : index
    %8 = vector.load %arg3[%c0_14, %c0_15] : memref<1x128xf32, #tpu.memory_space<vmem>>, vector<1x128xf32>
    %c0_16 = arith.constant 0 : index
    %c0_17 = arith.constant 0 : index
    %c0_18 = arith.constant 0 : index
    %9 = vector.load %arg9[%c0_16, %c0_17, %c0_18] : memref<2x18x64xbf16, #tpu.memory_space<vmem>>, vector<2x16x64xbf16>
    %10 = vector.shape_cast %9 : vector<2x16x64xbf16> to vector<32x64xbf16>
    %c0_19 = arith.constant 0 : index
    %c0_20 = arith.constant 0 : index
    %c0_21 = arith.constant 0 : index
    %11 = vector.load %arg1[%c0_19, %c0_20, %c0_21] : memref<3x64x128xbf16, #tpu.memory_space<vmem>>, vector<1x64x128xbf16>
    %12 = vector.shape_cast %11 : vector<1x64x128xbf16> to vector<64x128xbf16>
    %cst_22 = arith.constant dense<0.000000e+00> : vector<32x128xf32>
    %13 = tpu.matmul %10, %12, %cst_22 {dimension_numbers = #tpu.dot_dimension_numbers<[1], [0], [0], [1], [0, 0, 1, 1], [], []>} : vector<32x64xbf16>, vector<64x128xbf16>, vector<32x128xf32> -> vector<32x128xf32>
    %c0_23 = arith.constant 0 : index
    %c1_24 = arith.constant 1 : index
    %c0_25 = arith.constant 0 : index
    %14 = vector.load %arg9[%c0_23, %c1_24, %c0_25] : memref<2x18x64xbf16, #tpu.memory_space<vmem>>, vector<2x16x64xbf16>
    %15 = vector.shape_cast %14 : vector<2x16x64xbf16> to vector<32x64xbf16>
    %c1_26 = arith.constant 1 : index
    %c0_27 = arith.constant 0 : index
    %c0_28 = arith.constant 0 : index
    %16 = vector.load %arg1[%c1_26, %c0_27, %c0_28] : memref<3x64x128xbf16, #tpu.memory_space<vmem>>, vector<1x64x128xbf16>
    %17 = vector.shape_cast %16 : vector<1x64x128xbf16> to vector<64x128xbf16>
    %cst_29 = arith.constant dense<0.000000e+00> : vector<32x128xf32>
    %18 = tpu.matmul %15, %17, %cst_29 {dimension_numbers = #tpu.dot_dimension_numbers<[1], [0], [0], [1], [0, 0, 1, 1], [], []>} : vector<32x64xbf16>, vector<64x128xbf16>, vector<32x128xf32> -> vector<32x128xf32>
    %19 = arith.addf %13, %18 : vector<32x128xf32>
    %c0_30 = arith.constant 0 : index
    %c2 = arith.constant 2 : index
    %c0_31 = arith.constant 0 : index
    %20 = vector.load %arg9[%c0_30, %c2, %c0_31] : memref<2x18x64xbf16, #tpu.memory_space<vmem>>, vector<2x16x64xbf16>
    %21 = vector.shape_cast %20 : vector<2x16x64xbf16> to vector<32x64xbf16>
    %c2_32 = arith.constant 2 : index
    %c0_33 = arith.constant 0 : index
    %c0_34 = arith.constant 0 : index
    %22 = vector.load %arg1[%c2_32, %c0_33, %c0_34] : memref<3x64x128xbf16, #tpu.memory_space<vmem>>, vector<1x64x128xbf16>
    %23 = vector.shape_cast %22 : vector<1x64x128xbf16> to vector<64x128xbf16>
    %cst_35 = arith.constant dense<0.000000e+00> : vector<32x128xf32>
    %24 = tpu.matmul %21, %23, %cst_35 {dimension_numbers = #tpu.dot_dimension_numbers<[1], [0], [0], [1], [0, 0, 1, 1], [], []>} : vector<32x64xbf16>, vector<64x128xbf16>, vector<32x128xf32> -> vector<32x128xf32>
    %25 = arith.addf %19, %24 : vector<32x128xf32>
    %cst_36 = arith.constant dense<0.000000e+00> : vector<128xf32>
    %26 = vector.multi_reduction <add>, %25, %cst_36 [0] : vector<32x128xf32> to vector<128xf32>
    %27 = vector.shape_cast %26 : vector<128xf32> to vector<1x128xf32>
    %28 = arith.mulf %25, %25 : vector<32x128xf32>
    %cst_37 = arith.constant dense<0.000000e+00> : vector<128xf32>
    %29 = vector.multi_reduction <add>, %28, %cst_37 [0] : vector<32x128xf32> to vector<128xf32>
    %30 = vector.shape_cast %29 : vector<128xf32> to vector<1x128xf32>
    %cst_38 = arith.constant dense<0.000000e+00> : vector<1x128xf32>
    %31 = tpu.matmul %27, %0, %cst_38 {dimension_numbers = #tpu.dot_dimension_numbers<[1], [0], [0], [1], [0, 0, 1, 1], [], []>} : vector<1x128xf32>, vector<128x128xf32>, vector<1x128xf32> -> vector<1x128xf32>
    %cst_39 = arith.constant 3.125000e-02 : f32
    %32 = vector.broadcast %cst_39 : f32 to vector<1x128xf32>
    %33 = arith.mulf %31, %32 : vector<1x128xf32>
    %cst_40 = arith.constant dense<0.000000e+00> : vector<1x128xf32>
    %34 = tpu.matmul %30, %0, %cst_40 {dimension_numbers = #tpu.dot_dimension_numbers<[1], [0], [0], [1], [0, 0, 1, 1], [], []>} : vector<1x128xf32>, vector<128x128xf32>, vector<1x128xf32> -> vector<1x128xf32>
    %cst_41 = arith.constant 3.125000e-02 : f32
    %35 = vector.broadcast %cst_41 : f32 to vector<1x128xf32>
    %36 = arith.mulf %34, %35 : vector<1x128xf32>
    %37 = arith.mulf %33, %33 : vector<1x128xf32>
    %38 = arith.subf %36, %37 : vector<1x128xf32>
    %cst_42 = arith.constant 9.99999974E-6 : f32
    %39 = vector.broadcast %cst_42 : f32 to vector<1x128xf32>
    %40 = arith.addf %38, %39 : vector<1x128xf32>
    %41 = math.rsqrt %40 : vector<1x128xf32>
    %42 = arith.mulf %7, %41 : vector<1x128xf32>
    %43 = vector.broadcast %42 : vector<1x128xf32> to vector<32x128xf32>
    %44 = arith.mulf %25, %43 : vector<32x128xf32>
    %45 = arith.mulf %33, %42 : vector<1x128xf32>
    %46 = arith.subf %8, %45 : vector<1x128xf32>
    %47 = vector.broadcast %46 : vector<1x128xf32> to vector<32x128xf32>
    %48 = arith.addf %44, %47 : vector<32x128xf32>
    %cst_43 = arith.constant 0.000000e+00 : f32
    %49 = vector.broadcast %cst_43 : f32 to vector<32x128xf32>
    %50 = arith.maximumf %48, %49 : vector<32x128xf32>
    %cst_44 = arith.constant 0.000000e+00 : bf16
    %51 = vector.broadcast %cst_44 : bf16 to vector<2x1x128xbf16>
    %c0_45 = arith.constant 0 : index
    %c0_46 = arith.constant 0 : index
    %c0_47 = arith.constant 0 : index
    %52 = vector.load %arg10[%c0_45, %c0_46, %c0_47] : memref<2x18x128xbf16, #tpu.memory_space<vmem>>, vector<2x1x128xbf16>
    tpu.vector_store %arg10[%c0_45, %c0_46, %c0_47], %51 {strides = array<i32>} : memref<2x18x128xbf16, #tpu.memory_space<vmem>>, vector<2x1x128xbf16>,
    %cst_48 = arith.constant 0.000000e+00 : bf16
    %53 = vector.broadcast %cst_48 : bf16 to vector<2x1x128xbf16>
    %c0_49 = arith.constant 0 : index
    %c17_50 = arith.constant 17 : index
    %c0_51 = arith.constant 0 : index
    %54 = vector.load %arg10[%c0_49, %c17_50, %c0_51] : memref<2x18x128xbf16, #tpu.memory_space<vmem>>, vector<2x1x128xbf16>
    tpu.vector_store %arg10[%c0_49, %c17_50, %c0_51], %53 {strides = array<i32>} : memref<2x18x128xbf16, #tpu.memory_space<vmem>>, vector<2x1x128xbf16>,
    %55 = vector.shape_cast %50 : vector<32x128xf32> to vector<2x16x128xf32>
    %56 = arith.truncf %55 : vector<2x16x128xf32> to vector<2x16x128xbf16>
    %c0_52 = arith.constant 0 : index
    %c1_53 = arith.constant 1 : index
    %c0_54 = arith.constant 0 : index
    %57 = vector.load %arg10[%c0_52, %c1_53, %c0_54] : memref<2x18x128xbf16, #tpu.memory_space<vmem>>, vector<2x16x128xbf16>
    tpu.vector_store %arg10[%c0_52, %c1_53, %c0_54], %56 {strides = array<i32>} : memref<2x18x128xbf16, #tpu.memory_space<vmem>>, vector<2x16x128xbf16>,
    %c0_55 = arith.constant 0 : index
    %c0_56 = arith.constant 0 : index
    %58 = vector.load %arg5[%c0_55, %c0_56] : memref<1x128xf32, #tpu.memory_space<vmem>>, vector<1x128xf32>
    %c0_57 = arith.constant 0 : index
    %c0_58 = arith.constant 0 : index
    %59 = vector.load %arg6[%c0_57, %c0_58] : memref<1x128xf32, #tpu.memory_space<vmem>>, vector<1x128xf32>
    %c0_59 = arith.constant 0 : index
    %c0_60 = arith.constant 0 : index
    %c0_61 = arith.constant 0 : index
    %60 = vector.load %arg10[%c0_59, %c0_60, %c0_61] : memref<2x18x128xbf16, #tpu.memory_space<vmem>>, vector<2x16x128xbf16>
    %61 = vector.shape_cast %60 : vector<2x16x128xbf16> to vector<32x128xbf16>
    %c0_62 = arith.constant 0 : index
    %c0_63 = arith.constant 0 : index
    %c0_64 = arith.constant 0 : index
    %62 = vector.load %arg4[%c0_62, %c0_63, %c0_64] : memref<3x128x128xbf16, #tpu.memory_space<vmem>>, vector<1x128x128xbf16>
    %63 = vector.shape_cast %62 : vector<1x128x128xbf16> to vector<128x128xbf16>
    %cst_65 = arith.constant dense<0.000000e+00> : vector<32x128xf32>
    %64 = tpu.matmul %61, %63, %cst_65 {dimension_numbers = #tpu.dot_dimension_numbers<[1], [0], [0], [1], [0, 0, 1, 1], [], []>} : vector<32x128xbf16>, vector<128x128xbf16>, vector<32x128xf32> -> vector<32x128xf32>
    %c0_66 = arith.constant 0 : index
    %c1_67 = arith.constant 1 : index
    %c0_68 = arith.constant 0 : index
    %65 = vector.load %arg10[%c0_66, %c1_67, %c0_68] : memref<2x18x128xbf16, #tpu.memory_space<vmem>>, vector<2x16x128xbf16>
    %66 = vector.shape_cast %65 : vector<2x16x128xbf16> to vector<32x128xbf16>
    %c1_69 = arith.constant 1 : index
    %c0_70 = arith.constant 0 : index
    %c0_71 = arith.constant 0 : index
    %67 = vector.load %arg4[%c1_69, %c0_70, %c0_71] : memref<3x128x128xbf16, #tpu.memory_space<vmem>>, vector<1x128x128xbf16>
    %68 = vector.shape_cast %67 : vector<1x128x128xbf16> to vector<128x128xbf16>
    %cst_72 = arith.constant dense<0.000000e+00> : vector<32x128xf32>
    %69 = tpu.matmul %66, %68, %cst_72 {dimension_numbers = #tpu.dot_dimension_numbers<[1], [0], [0], [1], [0, 0, 1, 1], [], []>} : vector<32x128xbf16>, vector<128x128xbf16>, vector<32x128xf32> -> vector<32x128xf32>
    %70 = arith.addf %64, %69 : vector<32x128xf32>
    %c0_73 = arith.constant 0 : index
    %c2_74 = arith.constant 2 : index
    %c0_75 = arith.constant 0 : index
    %71 = vector.load %arg10[%c0_73, %c2_74, %c0_75] : memref<2x18x128xbf16, #tpu.memory_space<vmem>>, vector<2x16x128xbf16>
    %72 = vector.shape_cast %71 : vector<2x16x128xbf16> to vector<32x128xbf16>
    %c2_76 = arith.constant 2 : index
    %c0_77 = arith.constant 0 : index
    %c0_78 = arith.constant 0 : index
    %73 = vector.load %arg4[%c2_76, %c0_77, %c0_78] : memref<3x128x128xbf16, #tpu.memory_space<vmem>>, vector<1x128x128xbf16>
    %74 = vector.shape_cast %73 : vector<1x128x128xbf16> to vector<128x128xbf16>
    %cst_79 = arith.constant dense<0.000000e+00> : vector<32x128xf32>
    %75 = tpu.matmul %72, %74, %cst_79 {dimension_numbers = #tpu.dot_dimension_numbers<[1], [0], [0], [1], [0, 0, 1, 1], [], []>} : vector<32x128xbf16>, vector<128x128xbf16>, vector<32x128xf32> -> vector<32x128xf32>
    %76 = arith.addf %70, %75 : vector<32x128xf32>
    %cst_80 = arith.constant dense<0.000000e+00> : vector<128xf32>
    %77 = vector.multi_reduction <add>, %76, %cst_80 [0] : vector<32x128xf32> to vector<128xf32>
    %78 = vector.shape_cast %77 : vector<128xf32> to vector<1x128xf32>
    %79 = arith.mulf %76, %76 : vector<32x128xf32>
    %cst_81 = arith.constant dense<0.000000e+00> : vector<128xf32>
    %80 = vector.multi_reduction <add>, %79, %cst_81 [0] : vector<32x128xf32> to vector<128xf32>
    %81 = vector.shape_cast %80 : vector<128xf32> to vector<1x128xf32>
    %cst_82 = arith.constant dense<0.000000e+00> : vector<1x128xf32>
    %82 = tpu.matmul %78, %0, %cst_82 {dimension_numbers = #tpu.dot_dimension_numbers<[1], [0], [0], [1], [0, 0, 1, 1], [], []>} : vector<1x128xf32>, vector<128x128xf32>, vector<1x128xf32> -> vector<1x128xf32>
    %cst_83 = arith.constant 3.125000e-02 : f32
    %83 = vector.broadcast %cst_83 : f32 to vector<1x128xf32>
    %84 = arith.mulf %82, %83 : vector<1x128xf32>
    %cst_84 = arith.constant dense<0.000000e+00> : vector<1x128xf32>
    %85 = tpu.matmul %81, %0, %cst_84 {dimension_numbers = #tpu.dot_dimension_numbers<[1], [0], [0], [1], [0, 0, 1, 1], [], []>} : vector<1x128xf32>, vector<128x128xf32>, vector<1x128xf32> -> vector<1x128xf32>
    %cst_85 = arith.constant 3.125000e-02 : f32
    %86 = vector.broadcast %cst_85 : f32 to vector<1x128xf32>
    %87 = arith.mulf %85, %86 : vector<1x128xf32>
    %88 = arith.mulf %84, %84 : vector<1x128xf32>
    %89 = arith.subf %87, %88 : vector<1x128xf32>
    %cst_86 = arith.constant 9.99999974E-6 : f32
    %90 = vector.broadcast %cst_86 : f32 to vector<1x128xf32>
    %91 = arith.addf %89, %90 : vector<1x128xf32>
    %92 = math.rsqrt %91 : vector<1x128xf32>
    %93 = arith.mulf %58, %92 : vector<1x128xf32>
    %94 = vector.broadcast %93 : vector<1x128xf32> to vector<32x128xf32>
    %95 = arith.mulf %76, %94 : vector<32x128xf32>
    %96 = arith.mulf %84, %93 : vector<1x128xf32>
    %97 = arith.subf %59, %96 : vector<1x128xf32>
    %98 = vector.broadcast %97 : vector<1x128xf32> to vector<32x128xf32>
    %99 = arith.addf %95, %98 : vector<32x128xf32>
    %cst_87 = arith.constant 0.000000e+00 : f32
    %100 = vector.broadcast %cst_87 : f32 to vector<32x128xf32>
    %101 = arith.maximumf %99, %100 : vector<32x128xf32>
    %c0_88 = arith.constant 0 : index
    %c0_89 = arith.constant 0 : index
    %102 = vector.load %arg8[%c0_88, %c0_89] : memref<32x128xf32, #tpu.memory_space<vmem>>, vector<32x128xf32>
    tpu.vector_store %arg8[%c0_88, %c0_89], %101 {strides = array<i32>} : memref<32x128xf32, #tpu.memory_space<vmem>>, vector<32x128xf32>,
    return
  }
}

</mosaic_0001>

<llo_original>
// kernel: tile.28
$region0: #{tile.28}
  #allocation0 [shape = 's32[1]{0}', space=sflag, size = 0x4, scoped, tag = 'scoped memory for tile.28']
  %s0 = inlined_call_operand.vmem [shape: f32[8], index: 0, kind: input, shape index: {}]
  %s1 = inlined_call_operand.vmem [shape: f32[16,8], index: 1, kind: output, shape index: {}]
  // Predicated region
  $region2: #{tile.28} parent=0 // pred_check
    _
  $region3: #{tile.28} parent=0 // pred_check_branch
    %3 = sbr.rel (0) target = $region5
  $region4: #{tile.28} parent=0 // pred_region
    _
  $region5: #{tile.28} parent=0 // pred_fallthru
    _
  %v4 = vld [vmem:[%s0] ss:$0 sm:$0xff]
  %5 = vst [vmem:[%s1] sm:$0xff] %v4
  %s6 = scalar_lea.vmem %s1, 8
  %7 = vst [vmem:[%s6] sm:$0xff] %v4

// kernel: tile.29
$region0: #{tile.29}
  %s0 = inlined_call_operand.vmem [shape: f32[16,8], index: 0, kind: input, shape index: {}]
  %s1 = inlined_call_operand.vmem [shape: f32[1,128], index: 1, kind: output, shape index: {}]
  $region1: #{tile.29} parent=0
    #allocation0 [shape = 'u8[4096]{0}', space=vmem, size = 0x1000, scoped, tag = 'scoped mem for output reshape']
    %v2 = vld [vmem:[%s0] sm:$0x1]
    %vm3 = vcmask 64512
    %4 = vst.msk [vmem:[#allocation0] sm:$0x1] %vm3, %v2
    %s5 = scalar_lea.vmem %s0, 15
    %v6 = vld [vmem:[%s5] sm:$0x1]
    %7 = vrot.lane.b32.xlu0 %v6, 120
    %v8 = vpop.permute.xlu0 %7
    %vm9 = vcmask 1048512
    %10 = vst.msk [vmem:[#allocation0] sm:$0x1] %vm9, %v8
    %s11 = scalar_lea.vmem %s0, 14
    %v12 = vld [vmem:[%s11] sm:$0x1]
    %13 = vrot.lane.b32.xlu0 %v12, 112
    %v14 = vpop.permute.xlu0 %13
    %vm15 = vcmask 982912
    %16 = vst.msk [vmem:[#allocation0] sm:$0x1] %vm15, %v14
    %s17 = scalar_lea.vmem %s0, 13
    %v18 = vld [vmem:[%s17] sm:$0x1]
    %19 = vrot.lane.b32.xlu0 %v18, 104
    %v20 = vpop.permute.xlu0 %19
    %vm21 = vcmask 917312
    %22 = vst.msk [vmem:[#allocation0] sm:$0x1] %vm21, %v20
    %s23 = scalar_lea.vmem %s0, 12
    %v24 = vld [vmem:[%s23] sm:$0x1]
    %25 = vrot.lane.b32.xlu0 %v24, 96
    %v26 = vpop.permute.xlu0 %25
    %vm27 = vcmask 851712
    %28 = vst.msk [vmem:[#allocation0] sm:$0x1] %vm27, %v26
    %s29 = scalar_lea.vmem %s0, 11
    %v30 = vld [vmem:[%s29] sm:$0x1]
    %31 = vrot.lane.b32.xlu0 %v30, 88
    %v32 = vpop.permute.xlu0 %31
    %vm33 = vcmask 786112
    %34 = vst.msk [vmem:[#allocation0] sm:$0x1] %vm33, %v32
    %s35 = scalar_lea.vmem %s0, 10
    %v36 = vld [vmem:[%s35] sm:$0x1]
    %37 = vrot.lane.b32.xlu0 %v36, 80
    %v38 = vpop.permute.xlu0 %37
    %vm39 = vcmask 720512
    %40 = vst.msk [vmem:[#allocation0] sm:$0x1] %vm39, %v38
    %s41 = scalar_lea.vmem %s0, 9
    %v42 = vld [vmem:[%s41] sm:$0x1]
    %43 = vrot.lane.b32.xlu0 %v42, 72
    %v44 = vpop.permute.xlu0 %43
    %vm45 = vcmask 654912
    %46 = vst.msk [vmem:[#allocation0] sm:$0x1] %vm45, %v44
    %s47 = scalar_lea.vmem %s0, 8
    %v48 = vld [vmem:[%s47] sm:$0x1]
    %49 = vrot.lane.b32.xlu0 %v48, 64
    %v50 = vpop.permute.xlu0 %49
    %vm51 = vcmask 589312
    %52 = vst.msk [vmem:[#allocation0] sm:$0x1] %vm51, %v50
    %s53 = scalar_lea.vmem %s0, 7
    %v54 = vld [vmem:[%s53] sm:$0x1]
    %55 = vrot.lane.b32.xlu0 %v54, 56
    %v56 = vpop.permute.xlu0 %55
    %vm57 = vcmask 523712
    %58 = vst.msk [vmem:[#allocation0] sm:$0x1] %vm57, %v56
    %s59 = scalar_lea.vmem %s0, 6
    %v60 = vld [vmem:[%s59] sm:$0x1]
    %61 = vrot.lane.b32.xlu0 %v60, 48
    %v62 = vpop.permute.xlu0 %61
    %vm63 = vcmask 458112
    %64 = vst.msk [vmem:[#allocation0] sm:$0x1] %vm63, %v62
    %s65 = scalar_lea.vmem %s0, 5
    %v66 = vld [vmem:[%s65] sm:$0x1]
    %67 = vrot.lane.b32.xlu0 %v66, 40
    %v68 = vpop.permute.xlu0 %67
    %vm69 = vcmask 392512
    %70 = vst.msk [vmem:[#allocation0] sm:$0x1] %vm69, %v68
    %s71 = scalar_lea.vmem %s0, 4
    %v72 = vld [vmem:[%s71] sm:$0x1]
    %73 = vrot.lane.b32.xlu0 %v72, 32
    %v74 = vpop.permute.xlu0 %73
    %vm75 = vcmask 326912
    %76 = vst.msk [vmem:[#allocation0] sm:$0x1] %vm75, %v74
    %s77 = scalar_lea.vmem %s0, 3
    %v78 = vld [vmem:[%s77] sm:$0x1]
    %79 = vrot.lane.b32.xlu0 %v78, 24
    %v80 = vpop.permute.xlu0 %79
    %vm81 = vcmask 261312
    %82 = vst.msk [vmem:[#allocation0] sm:$0x1] %vm81, %v80
    %s83 = scalar_lea.vmem %s0, 2
    %v84 = vld [vmem:[%s83] sm:$0x1]
    %85 = vrot.lane.b32.xlu0 %v84, 16
    %v86 = vpop.permute.xlu0 %85
    %vm87 = vcmask 195712
    %88 = vst.msk [vmem:[#allocation0] sm:$0x1] %vm87, %v86
    %s89 = scalar_lea.vmem %s0, 1
    %v90 = vld [vmem:[%s89] sm:$0x1]
    %91 = vrot.lane.b32.xlu0 %v90, 8
    %v92 = vpop.permute.xlu0 %91
    %vm93 = vcmask 130112
    %94 = vst.msk [vmem:[#allocation0] sm:$0x1] %vm93, %v92
    %s96 = sshllo.u32 0, 1
    %v98 = vld [vmem:[#allocation0] sm:%s96]
    %s99 = sshllo.u32 0, 1
    %100 = vst [vmem:[%s1] sm:%s99] %v98

// kernel: double_nested_conv.1
$region0: #{double_nested_conv.1}
  #allocation0 [shape = 'u32[]', space=smem, size = 0x4, offset = 0x4, fixed_abs, tag = 'smem constant byte address 0x4 - core index']
  #allocation1 [shape = 'u32[144,128]{1,0:T(1,128)}', space=vmem, size = 0x12000, scoped, tag = 'internal scratch']
  #allocation2 [shape = 'bf16[2,18,64]{2,1,0:T(8,128)(2,1)}', space=vmem, size = 0x3000, scoped, tag = 'scratch operand']
  #allocation3 [shape = 'bf16[2,18,128]{2,1,0:T(8,128)(2,1)}', space=vmem, size = 0x3000, scoped, tag = 'scratch operand']
  %s0 = inlined_call_operand.vmem [shape: bf16[2,16,64], index: 0, kind: input, shape index: {}]
  %s1 = inlined_call_operand.vmem [shape: bf16[3,64,128], index: 1, kind: input, shape index: {}]
  %s2 = inlined_call_operand.vmem [shape: f32[1,128], index: 2, kind: input, shape index: {}]
  %s3 = inlined_call_operand.vmem [shape: f32[1,128], index: 3, kind: input, shape index: {}]
  %s4 = inlined_call_operand.vmem [shape: bf16[3,128,128], index: 4, kind: input, shape index: {}]
  %s5 = inlined_call_operand.vmem [shape: f32[1,128], index: 5, kind: input, shape index: {}]
  %s6 = inlined_call_operand.vmem [shape: f32[1,128], index: 6, kind: input, shape index: {}]
  %s7 = inlined_call_operand.vmem [shape: f32[128,128], index: 7, kind: input, shape index: {}]
  %s8 = inlined_call_operand.vmem [shape: f32[32,128], index: 8, kind: output, shape index: {}]
  %s9 = sld [smem:[#allocation0]]
  $region42: #{double_nested_conv.1} parent=0
    _
  %s11 = ssub.s32 1, %s9
  %s12 = scalar_select 0, %s11, %s9
  // Predicated region
  $region2: #{double_nested_conv.1} parent=0 // pred_check
    _
  $region3: #{double_nested_conv.1} parent=0 // pred_check_branch
    %14 = sbr.rel (0) target = $region5
  $region4: #{double_nested_conv.1} parent=0 // pred_region
    _
  $region5: #{double_nested_conv.1} parent=0 // pred_fallthru
    _
  // Predicated region
  $region6: #{double_nested_conv.1} parent=0 // pred_check
    _
  $region7: #{double_nested_conv.1} parent=0 // pred_check_branch
    %16 = sbr.rel (0) target = $region9
  $region8: #{double_nested_conv.1} parent=0 // pred_region
    _
  $region9: #{double_nested_conv.1} parent=0 // pred_fallthru
    _
  // Predicated region
  $region10: #{double_nested_conv.1} parent=0 // pred_check
    _
  $region11: #{double_nested_conv.1} parent=0 // pred_check_branch
    %18 = sbr.rel (0) target = $region13
  $region12: #{double_nested_conv.1} parent=0 // pred_region
    _
  $region13: #{double_nested_conv.1} parent=0 // pred_fallthru
    _
  // Predicated region
  $region14: #{double_nested_conv.1} parent=0 // pred_check
    _
  $region15: #{double_nested_conv.1} parent=0 // pred_check_branch
    %20 = sbr.rel (0) target = $region17
  $region16: #{double_nested_conv.1} parent=0 // pred_region
    _
  $region17: #{double_nested_conv.1} parent=0 // pred_fallthru
    _
  // Predicated region
  $region18: #{double_nested_conv.1} parent=0 // pred_check
    _
  $region19: #{double_nested_conv.1} parent=0 // pred_check_branch
    %22 = sbr.rel (0) target = $region21
  $region20: #{double_nested_conv.1} parent=0 // pred_region
    _
  $region21: #{double_nested_conv.1} parent=0 // pred_fallthru
    _
  // Predicated region
  $region22: #{double_nested_conv.1} parent=0 // pred_check
    _
  $region23: #{double_nested_conv.1} parent=0 // pred_check_branch
    %24 = sbr.rel (0) target = $region25
  $region24: #{double_nested_conv.1} parent=0 // pred_region
    _
  $region25: #{double_nested_conv.1} parent=0 // pred_fallthru
    _
  // Predicated region
  $region26: #{double_nested_conv.1} parent=0 // pred_check
    _
  $region27: #{double_nested_conv.1} parent=0 // pred_check_branch
    %26 = sbr.rel (0) target = $region29
  $region28: #{double_nested_conv.1} parent=0 // pred_region
    _
  $region29: #{double_nested_conv.1} parent=0 // pred_fallthru
    _
  // Predicated region
  $region30: #{double_nested_conv.1} parent=0 // pred_check
    _
  $region31: #{double_nested_conv.1} parent=0 // pred_check_branch
    %28 = sbr.rel (0) target = $region33
  $region32: #{double_nested_conv.1} parent=0 // pred_region
    _
  $region33: #{double_nested_conv.1} parent=0 // pred_fallthru
    _
  %v30 = vld [vmem:[%s7] sm:$0xff]
  %v31 = vld [vmem:[%s7 + $0x8] sm:$0xff]
  %v32 = vld [vmem:[%s7 + $0x10] sm:$0xff]
  %v33 = vld [vmem:[%s7 + $0x18] sm:$0xff]
  %v34 = vld [vmem:[%s7 + $0x20] sm:$0xff]
  %v35 = vld [vmem:[%s7 + $0x28] sm:$0xff]
  %v36 = vld [vmem:[%s7 + $0x30] sm:$0xff]
  %v37 = vld [vmem:[%s7 + $0x38] sm:$0xff]
  %v38 = vld [vmem:[%s7 + $0x40] sm:$0xff]
  %v39 = vld [vmem:[%s7 + $0x48] sm:$0xff]
  %v40 = vld [vmem:[%s7 + $0x50] sm:$0xff]
  %v41 = vld [vmem:[%s7 + $0x58] sm:$0xff]
  %v42 = vld [vmem:[%s7 + $0x60] sm:$0xff]
  %v43 = vld [vmem:[%s7 + $0x68] sm:$0xff]
  %v44 = vld [vmem:[%s7 + $0x70] sm:$0xff]
  %v45 = vld [vmem:[%s7 + $0x78] sm:$0xff]
  %vm46 = vcmask 516096
  %vm47 = vsmask.f32 256
  %vm48 = vmand %vm46, %vm47
  %v49 = vld [vmem:[#allocation2] sm:$0x1]
  %v50 = vsel %vm48, 0, %v49
  %51 = vst [vmem:[#allocation2] sm:$0x1] %v50
  %v52 = vld [vmem:[#allocation2 + $0xc] sm:$0x1]
  %v53 = vsel %vm48, 0, %v52
  %54 = vst [vmem:[#allocation2 + $0xc] sm:$0x1] %v53
  %vm55 = vsmask.f32 7938
  %vm56 = vmand %vm46, %vm55
  %v57 = vld [vmem:[#allocation2 + $0x8] sm:$0x1]
  %v58 = vsel %vm56, 0, %v57
  %59 = vst [vmem:[#allocation2 + $0x8] sm:$0x1] %v58
  %v60 = vld [vmem:[#allocation2 + $0x14] sm:$0x1]
  %v61 = vsel %vm56, 0, %v60
  %62 = vst [vmem:[#allocation2 + $0x14] sm:$0x1] %v61
  %v63 = vld [vmem:[%s0] sm:$0xf]
  %v64 = vld [vmem:[%s0 + $0x4] sm:$0xf]
  %v65 = vld [vmem:[%s0 + $0x8] sm:$0xf]
  %v66 = vld [vmem:[%s0 + $0xc] sm:$0xf]
  %vm67 = vsmask.f32 4368
  %vm68 = vmor %vm47, %vm67
  %v70 = vshrl.u32 %v63, 16
  %v72 = vrot.slane %v70, 7
  %v73 = vshll.u32 %v63, 16
  %v75 = vor.u32 %v72, %v73
  %v76 = vrot.slane %v72, 4
  %v78 = vshrl.u32 %v64, 16
  %v80 = vrot.slane %v78, 7
  %v81 = vshll.u32 %v64, 16
  %v83 = vor.u32 %v80, %v81
  %v84 = vsel %vm68, %v76, %v83
  %v85 = vrot.slane %v80, 4
  %v87 = vshrl.u32 %v65, 16
  %v89 = vrot.slane %v87, 7
  %v90 = vshll.u32 %v65, 16
  %v92 = vor.u32 %v89, %v90
  %v93 = vrot.slane %v89, 4
  %v95 = vshrl.u32 %v66, 16
  %v97 = vrot.slane %v95, 7
  %v98 = vshll.u32 %v66, 16
  %v100 = vor.u32 %v97, %v98
  %v101 = vsel %vm68, %v93, %v100
  %v102 = vrot.slane %v97, 4
  %vm109 = vcmask 519168
  %vm110 = vmand %vm109, %vm55
  %v111 = vld [vmem:[#allocation2] sm:$0xf]
  %v112 = vsel %vm110, %v75, %v111
  %113 = vst [vmem:[#allocation2] sm:$0xf] %v112
  %vm114 = vcmask 519168
  %115 = vst.msk [vmem:[#allocation2 + $0x4] sm:$0xf] %vm114, %v84
  %v116 = vld [vmem:[#allocation2 + $0x8] sm:$0x1]
  %v117 = vsel %vm48, %v85, %v116
  %118 = vst [vmem:[#allocation2 + $0x8] sm:$0x1] %v117
  %v119 = vld [vmem:[#allocation2 + $0xc] sm:$0xf]
  %v120 = vsel %vm110, %v92, %v119
  %121 = vst [vmem:[#allocation2 + $0xc] sm:$0xf] %v120
  %122 = vst.msk [vmem:[#allocation2 + $0x10] sm:$0xf] %vm114, %v101
  %v123 = vld [vmem:[#allocation2 + $0x14] sm:$0x1]
  %v124 = vsel %vm48, %v102, %v123
  %125 = vst [vmem:[#allocation2 + $0x14] sm:$0x1] %v124
  %v126 = vld [vmem:[%s2] sm:$0x1]
  %v127 = vld [vmem:[%s3] sm:$0x1]
  %v128 = vld [vmem:[#allocation2] sm:$0xf]
  %v129 = vld [vmem:[#allocation2 + $0x4] sm:$0xf]
  %v130 = vld [vmem:[#allocation2 + $0xc] sm:$0xf]
  %v131 = vld [vmem:[#allocation2 + $0x10] sm:$0xf]
  %v132 = vld [vmem:[%s1] sm:$0xf]
  %v133 = vld [vmem:[%s1 + $0x4] sm:$0xf]
  %v134 = vld [vmem:[%s1 + $0x8] sm:$0xf]
  %v135 = vld [vmem:[%s1 + $0xc] sm:$0xf]
  %v136 = vld [vmem:[%s1 + $0x10] sm:$0xf]
  %v137 = vld [vmem:[%s1 + $0x14] sm:$0xf]
  %v138 = vld [vmem:[%s1 + $0x18] sm:$0xf]
  %v139 = vld [vmem:[%s1 + $0x1c] sm:$0xf]
  %v140 = vld [vmem:[#allocation2 + $0x8] sm:$0x1]
  %v141 = vld [vmem:[#allocation2 + $0x14] sm:$0x1]
  %vm142 = vsmask.f32 3328
  %vm143 = vsmask.f32 7440
  %vm144 = vmor %vm142, %vm143
  %v146 = vshrl.u32 %v128, 16
  %v148 = vrot.slane %v146, 4
  %v149 = vshll.u32 %v128, 16
  %v151 = vrot.slane %v149, 5
  %v152 = vor.u32 %v148, %v151
  %v153 = vrot.slane %v152, 4
  %v155 = vshll.u32 %v129, 16
  %v157 = vrot.slane %v155, 5
  %v158 = vsel %vm144, %v153, %v157
  %v159 = vshrl.u32 %v129, 16
  %v161 = vrot.slane %v159, 4
  %v162 = vor.u32 %v161, %v157
  %v163 = vrot.slane %v162, 4
  %v165 = vshll.u32 %v140, 16
  %v167 = vrot.slane %v165, 5
  %v168 = vsel %vm144, %v163, %v167
  %v170 = vshrl.u32 %v130, 16
  %v172 = vrot.slane %v170, 4
  %v173 = vshll.u32 %v130, 16
  %v175 = vrot.slane %v173, 5
  %v176 = vor.u32 %v172, %v175
  %v177 = vrot.slane %v176, 4
  %v179 = vshll.u32 %v131, 16
  %v181 = vrot.slane %v179, 5
  %v182 = vsel %vm144, %v177, %v181
  %v183 = vshrl.u32 %v131, 16
  %v185 = vrot.slane %v183, 4
  %v186 = vor.u32 %v185, %v181
  %v187 = vrot.slane %v186, 4
  %v189 = vshll.u32 %v141, 16
  %v191 = vrot.slane %v189, 5
  %v192 = vsel %vm144, %v187, %v191
  %s193 = scalar_lea.vmem %s1, 32
  %v194 = vld [vmem:[%s193] sm:$0xf]
  %v195 = vld [vmem:[%s193 + $0x4] sm:$0xf]
  %v196 = vld [vmem:[%s193 + $0x8] sm:$0xf]
  %v197 = vld [vmem:[%s193 + $0xc] sm:$0xf]
  %v198 = vld [vmem:[%s193 + $0x10] sm:$0xf]
  %v199 = vld [vmem:[%s193 + $0x14] sm:$0xf]
  %v200 = vld [vmem:[%s193 + $0x18] sm:$0xf]
  %v201 = vld [vmem:[%s193 + $0x1c] sm:$0xf]
  %v202 = vunpack.c.l.b16 %v158
  %v203 = vunpack.c.l.b16 %v168
  %v204 = vunpack.c.l.b16 %v182
  %v205 = vunpack.c.l.b16 %v192
  %v206 = vpack.c.b16 %v203, %v202
  %v207 = vpack.c.b16 %v205, %v204
  %v216 = vunpack.c.l.b16 %v194
  %v217 = vunpack.c.l.b16 %v195
  %v218 = vunpack.c.l.b16 %v196
  %v219 = vunpack.c.l.b16 %v197
  %v220 = vunpack.c.l.b16 %v198
  %v221 = vunpack.c.l.b16 %v199
  %v222 = vunpack.c.l.b16 %v200
  %v223 = vunpack.c.l.b16 %v201
  %v224 = vpack.c.b16 %v217, %v216
  %v225 = vpack.c.b16 %v219, %v218
  %v226 = vpack.c.b16 %v221, %v220
  %v227 = vpack.c.b16 %v223, %v222
  %vm232 = vcmask 523264
  %v234 = vsel %vm232, %v206, 0
  %v237 = vsel %vm232, %v207, 0
  %239 = vmatprep.subr.bf16.mxu0 0
  %240 = vmatpush1.bf16.msra.mxu0 %v224
  %241 = vmatprep.subr.bf16.mxu0 0
  %242 = vmatpush1.bf16.msra.mxu0 %v225
  %243 = vmatprep.subr.bf16.mxu0 0
  %244 = vmatpush1.bf16.msra.mxu0 %v226
  %245 = vmatprep.subr.bf16.mxu0 0
  %246 = vmatpush1.bf16.msra.mxu0 %v227
  %247 = vmatprep.subr.bf16.mxu0 0
  %248 = vmatpush1.bf16.msra.mxu0 0
  %249 = vmatprep.subr.bf16.mxu0 0
  %250 = vmatpush1.bf16.msra.mxu0 0
  %251 = vmatprep.subr.bf16.mxu0 0
  %252 = vmatpush1.bf16.msra.mxu0 0
  %253 = vmatprep.subr.bf16.mxu0 0
  %254 = vmatpush1.bf16.msra.mxu0 0
  %255 = vmatprep.subr.bf16.mxu0 0
  %256 = vmatpush1.bf16.msra.mxu0 0
  %257 = vmatprep.subr.bf16.mxu0 0
  %258 = vmatpush1.bf16.msra.mxu0 0
  %259 = vmatprep.subr.bf16.mxu0 0
  %260 = vmatpush1.bf16.msra.mxu0 0
  %261 = vmatprep.subr.bf16.mxu0 0
  %262 = vmatpush1.bf16.msra.mxu0 0
  %263 = vmatprep.subr.bf16.mxu0 0
  %264 = vmatpush1.bf16.msra.mxu0 0
  %265 = vmatprep.subr.bf16.mxu0 0
  %266 = vmatpush1.bf16.msra.mxu0 0
  %267 = vmatprep.subr.bf16.mxu0 0
  %268 = vmatpush1.bf16.msra.mxu0 0
  %269 = vmatprep.subr.bf16.mxu0 0
  %270 = vmatpush1.bf16.msra.mxu0 0
  %271 = vmatprep.mubr.bf16.mxu0 0
  %272 = vmatmul.mubr.bf16.gmra.mrb[0].mxu0 %v234
  %v273 = vpop.f32.mrb[0].mxu0
  %v274 = vadd.f32 0.0, %v273
  %v275 = vpop.f32.mrb[0].mxu0
  %v276 = vpop.f32.mrb[0].mxu0
  %v277 = vadd.f32 0.0, %v276
  %v278 = vpop.f32.mrb[0].mxu0
  %279 = vmatprep.mubr.bf16.mxu0 0
  %280 = vmatmul.mubr.bf16.gmra.mrb[0].mxu0 %v237
  %v281 = vpop.f32.mrb[0].mxu0
  %v282 = vadd.f32 0.0, %v281
  %v283 = vpop.f32.mrb[0].mxu0
  %v284 = vpop.f32.mrb[0].mxu0
  %v285 = vadd.f32 0.0, %v284
  %v286 = vpop.f32.mrb[0].mxu0
  %287 = vdwg.mxu0
  %v292 = vunpack.c.l.b16 %v128
  %v293 = vunpack.c.l.b16 %v129
  %v294 = vunpack.c.l.b16 %v130
  %v295 = vunpack.c.l.b16 %v131
  %v296 = vpack.c.b16 %v293, %v292
  %v297 = vpack.c.b16 %v295, %v294
  %v306 = vunpack.c.l.b16 %v132
  %v307 = vunpack.c.l.b16 %v133
  %v308 = vunpack.c.l.b16 %v134
  %v309 = vunpack.c.l.b16 %v135
  %v310 = vunpack.c.l.b16 %v136
  %v311 = vunpack.c.l.b16 %v137
  %v312 = vunpack.c.l.b16 %v138
  %v313 = vunpack.c.l.b16 %v139
  %v314 = vpack.c.b16 %v307, %v306
  %v315 = vpack.c.b16 %v309, %v308
  %v316 = vpack.c.b16 %v311, %v310
  %v317 = vpack.c.b16 %v313, %v312
  %v323 = vsel %vm232, %v296, 0
  %v326 = vsel %vm232, %v297, 0
  %328 = vmatprep.subr.bf16.mxu0 0
  %329 = vmatpush1.bf16.msra.mxu0 %v314
  %330 = vmatprep.subr.bf16.mxu0 0
  %331 = vmatpush1.bf16.msra.mxu0 %v315
  %332 = vmatprep.subr.bf16.mxu0 0
  %333 = vmatpush1.bf16.msra.mxu0 %v316
  %334 = vmatprep.subr.bf16.mxu0 0
  %335 = vmatpush1.bf16.msra.mxu0 %v317
  %336 = vmatprep.subr.bf16.mxu0 0
  %337 = vmatpush1.bf16.msra.mxu0 0
  %338 = vmatprep.subr.bf16.mxu0 0
  %339 = vmatpush1.bf16.msra.mxu0 0
  %340 = vmatprep.subr.bf16.mxu0 0
  %341 = vmatpush1.bf16.msra.mxu0 0
  %342 = vmatprep.subr.bf16.mxu0 0
  %343 = vmatpush1.bf16.msra.mxu0 0
  %344 = vmatprep.subr.bf16.mxu0 0
  %345 = vmatpush1.bf16.msra.mxu0 0
  %346 = vmatprep.subr.bf16.mxu0 0
  %347 = vmatpush1.bf16.msra.mxu0 0
  %348 = vmatprep.subr.bf16.mxu0 0
  %349 = vmatpush1.bf16.msra.mxu0 0
  %350 = vmatprep.subr.bf16.mxu0 0
  %351 = vmatpush1.bf16.msra.mxu0 0
  %352 = vmatprep.subr.bf16.mxu0 0
  %353 = vmatpush1.bf16.msra.mxu0 0
  %354 = vmatprep.subr.bf16.mxu0 0
  %355 = vmatpush1.bf16.msra.mxu0 0
  %356 = vmatprep.subr.bf16.mxu0 0
  %357 = vmatpush1.bf16.msra.mxu0 0
  %358 = vmatprep.subr.bf16.mxu0 0
  %359 = vmatpush1.bf16.msra.mxu0 0
  %360 = vmatprep.mubr.bf16.mxu0 0
  %361 = vmatmul.mubr.bf16.gmra.mrb[0].mxu0 %v323
  %v362 = vpop.f32.mrb[0].mxu0
  %v363 = vadd.f32 %v274, %v362
  %v364 = vpop.f32.mrb[0].mxu0
  %v365 = vpop.f32.mrb[0].mxu0
  %v366 = vadd.f32 %v277, %v365
  %v367 = vpop.f32.mrb[0].mxu0
  %368 = vmatprep.mubr.bf16.mxu0 0
  %369 = vmatmul.mubr.bf16.gmra.mrb[0].mxu0 %v326
  %v370 = vpop.f32.mrb[0].mxu0
  %v371 = vadd.f32 %v282, %v370
  %v372 = vpop.f32.mrb[0].mxu0
  %v373 = vpop.f32.mrb[0].mxu0
  %v374 = vadd.f32 %v285, %v373
  %v375 = vpop.f32.mrb[0].mxu0
  %376 = vdwg.mxu0
  %v377 = vld [vmem:[#allocation2] sm:$0xe]
  %v378 = vld [vmem:[#allocation2 + $0xc] sm:$0xe]
  %vm383 = vcmask 1042432
  %vm384 = vcmask 1046532
  %vm385 = vmor %vm383, %vm384
  %v386 = vrot.slane %v377, 5
  %v387 = vrot.slane %v386, 4
  %v388 = vrot.slane %v129, 5
  %v389 = vsel %vm385, %v387, %v388
  %v390 = vrot.slane %v388, 4
  %v391 = vrot.slane %v140, 5
  %v392 = vsel %vm385, %v390, %v391
  %v393 = vrot.slane %v378, 5
  %v394 = vrot.slane %v393, 4
  %v395 = vrot.slane %v131, 5
  %v396 = vsel %vm385, %v394, %v395
  %v397 = vrot.slane %v395, 4
  %v398 = vrot.slane %v141, 5
  %v399 = vsel %vm385, %v397, %v398
  %s400 = scalar_lea.vmem %s1, 64
  %v401 = vld [vmem:[%s400] sm:$0xf]
  %v402 = vld [vmem:[%s400 + $0x4] sm:$0xf]
  %v403 = vld [vmem:[%s400 + $0x8] sm:$0xf]
  %v404 = vld [vmem:[%s400 + $0xc] sm:$0xf]
  %v405 = vld [vmem:[%s400 + $0x10] sm:$0xf]
  %v406 = vld [vmem:[%s400 + $0x14] sm:$0xf]
  %v407 = vld [vmem:[%s400 + $0x18] sm:$0xf]
  %v408 = vld [vmem:[%s400 + $0x1c] sm:$0xf]
  %v409 = vunpack.c.l.b16 %v389
  %v410 = vunpack.c.l.b16 %v392
  %v411 = vunpack.c.l.b16 %v396
  %v412 = vunpack.c.l.b16 %v399
  %v413 = vpack.c.b16 %v410, %v409
  %v414 = vpack.c.b16 %v412, %v411
  %v423 = vunpack.c.l.b16 %v401
  %v424 = vunpack.c.l.b16 %v402
  %v425 = vunpack.c.l.b16 %v403
  %v426 = vunpack.c.l.b16 %v404
  %v427 = vunpack.c.l.b16 %v405
  %v428 = vunpack.c.l.b16 %v406
  %v429 = vunpack.c.l.b16 %v407
  %v430 = vunpack.c.l.b16 %v408
  %v431 = vpack.c.b16 %v424, %v423
  %v432 = vpack.c.b16 %v426, %v425
  %v433 = vpack.c.b16 %v428, %v427
  %v434 = vpack.c.b16 %v430, %v429
  %v440 = vsel %vm232, %v413, 0
  %v443 = vsel %vm232, %v414, 0
  %445 = vmatprep.subr.bf16.mxu0 0
  %446 = vmatpush1.bf16.msra.mxu0 %v431
  %447 = vmatprep.subr.bf16.mxu0 0
  %448 = vmatpush1.bf16.msra.mxu0 %v432
  %449 = vmatprep.subr.bf16.mxu0 0
  %450 = vmatpush1.bf16.msra.mxu0 %v433
  %451 = vmatprep.subr.bf16.mxu0 0
  %452 = vmatpush1.bf16.msra.mxu0 %v434
  %453 = vmatprep.subr.bf16.mxu0 0
  %454 = vmatpush1.bf16.msra.mxu0 0
  %455 = vmatprep.subr.bf16.mxu0 0
  %456 = vmatpush1.bf16.msra.mxu0 0
  %457 = vmatprep.subr.bf16.mxu0 0
  %458 = vmatpush1.bf16.msra.mxu0 0
  %459 = vmatprep.subr.bf16.mxu0 0
  %460 = vmatpush1.bf16.msra.mxu0 0
  %461 = vmatprep.subr.bf16.mxu0 0
  %462 = vmatpush1.bf16.msra.mxu0 0
  %463 = vmatprep.subr.bf16.mxu0 0
  %464 = vmatpush1.bf16.msra.mxu0 0
  %465 = vmatprep.subr.bf16.mxu0 0
  %466 = vmatpush1.bf16.msra.mxu0 0
  %467 = vmatprep.subr.bf16.mxu0 0
  %468 = vmatpush1.bf16.msra.mxu0 0
  %469 = vmatprep.subr.bf16.mxu0 0
  %470 = vmatpush1.bf16.msra.mxu0 0
  %471 = vmatprep.subr.bf16.mxu0 0
  %472 = vmatpush1.bf16.msra.mxu0 0
  %473 = vmatprep.subr.bf16.mxu0 0
  %474 = vmatpush1.bf16.msra.mxu0 0
  %475 = vmatprep.subr.bf16.mxu0 0
  %476 = vmatpush1.bf16.msra.mxu0 0
  %477 = vmatprep.mubr.bf16.mxu0 0
  %478 = vmatmul.mubr.bf16.gmra.mrb[0].mxu0 %v440
  %v479 = vpop.f32.mrb[0].mxu0
  %v480 = vadd.f32 0.0, %v479
  %v481 = vpop.f32.mrb[0].mxu0
  %v482 = vpop.f32.mrb[0].mxu0
  %v483 = vadd.f32 0.0, %v482
  %v484 = vpop.f32.mrb[0].mxu0
  %485 = vmatprep.mubr.bf16.mxu0 0
  %486 = vmatmul.mubr.bf16.gmra.mrb[0].mxu0 %v443
  %v487 = vpop.f32.mrb[0].mxu0
  %v488 = vadd.f32 0.0, %v487
  %v489 = vpop.f32.mrb[0].mxu0
  %v490 = vpop.f32.mrb[0].mxu0
  %v491 = vadd.f32 0.0, %v490
  %v492 = vpop.f32.mrb[0].mxu0
  %493 = vdwg.mxu0
  %v494 = vadd.f32 %v363, %v480
  %v495 = vadd.f32 %v366, %v483
  %v496 = vadd.f32 %v371, %v488
  %v497 = vadd.f32 %v374, %v491
  %v498 = vadd.f32 %v494, %v495
  %v499 = vadd.f32 %v498, %v496
  %v500 = vadd.f32 %v499, %v497
  %v501 = vrot.slane %v500, 4
  %v502 = vadd.f32 %v500, %v501
  %v503 = vrot.slane %v502, 2
  %v504 = vadd.f32 %v502, %v503
  %v505 = vrot.slane %v504, 1
  %v506 = vadd.f32 %v504, %v505
  %v507 = vmul.f32 %v494, %v494
  %v508 = vmul.f32 %v495, %v495
  %v509 = vmul.f32 %v496, %v496
  %v510 = vmul.f32 %v497, %v497
  %v511 = vadd.f32 %v507, %v508
  %v512 = vadd.f32 %v511, %v509
  %v513 = vadd.f32 %v512, %v510
  %v514 = vrot.slane %v513, 4
  %v515 = vadd.f32 %v513, %v514
  %v516 = vrot.slane %v515, 2
  %v517 = vadd.f32 %v515, %v516
  %v518 = vrot.slane %v517, 1
  %v519 = vadd.f32 %v517, %v518
  %520 = vmatprep.subr.mxu0 0.0
  %521 = vmatpush1.msra.mxu0 %v30
  %522 = vmatprep.subr.mxu0 0.0
  %523 = vmatpush1.msra.mxu0 %v31
  %524 = vmatprep.subr.mxu0 0.0
  %525 = vmatpush1.msra.mxu0 %v32
  %526 = vmatprep.subr.mxu0 0.0
  %527 = vmatpush1.msra.mxu0 %v33
  %528 = vmatprep.subr.mxu0 0.0
  %529 = vmatpush1.msra.mxu0 %v34
  %530 = vmatprep.subr.mxu0 0.0
  %531 = vmatpush1.msra.mxu0 %v35
  %532 = vmatprep.subr.mxu0 0.0
  %533 = vmatpush1.msra.mxu0 %v36
  %534 = vmatprep.subr.mxu0 0.0
  %535 = vmatpush1.msra.mxu0 %v37
  %536 = vmatprep.subr.mxu0 0.0
  %537 = vmatpush1.msra.mxu0 %v38
  %538 = vmatprep.subr.mxu0 0.0
  %539 = vmatpush1.msra.mxu0 %v39
  %540 = vmatprep.subr.mxu0 0.0
  %541 = vmatpush1.msra.mxu0 %v40
  %542 = vmatprep.subr.mxu0 0.0
  %543 = vmatpush1.msra.mxu0 %v41
  %544 = vmatprep.subr.mxu0 0.0
  %545 = vmatpush1.msra.mxu0 %v42
  %546 = vmatprep.subr.mxu0 0.0
  %547 = vmatpush1.msra.mxu0 %v43
  %548 = vmatprep.subr.mxu0 0.0
  %549 = vmatpush1.msra.mxu0 %v44
  %550 = vmatprep.subr.mxu0 0.0
  %551 = vmatpush1.msra.mxu0 %v45
  %552 = vmatprep.subr.mxu0 0.0
  %553 = vmatpush1.msra.mxu0 0.0
  %554 = vmatprep.subr.mxu0 0.0
  %555 = vmatpush1.msra.mxu0 0.0
  %556 = vmatprep.subr.mxu0 0.0
  %557 = vmatpush1.msra.mxu0 0.0
  %558 = vmatprep.subr.mxu0 0.0
  %559 = vmatpush1.msra.mxu0 0.0
  %560 = vmatprep.subr.mxu0 0.0
  %561 = vmatpush1.msra.mxu0 0.0
  %562 = vmatprep.subr.mxu0 0.0
  %563 = vmatpush1.msra.mxu0 0.0
  %564 = vmatprep.subr.mxu0 0.0
  %565 = vmatpush1.msra.mxu0 0.0
  %566 = vmatprep.subr.mxu0 0.0
  %567 = vmatpush1.msra.mxu0 0.0
  %568 = vmatprep.subr.mxu0 0.0
  %569 = vmatpush1.msra.mxu0 0.0
  %570 = vmatprep.subr.mxu0 0.0
  %571 = vmatpush1.msra.mxu0 0.0
  %572 = vmatprep.subr.mxu0 0.0
  %573 = vmatpush1.msra.mxu0 0.0
  %574 = vmatprep.subr.mxu0 0.0
  %575 = vmatpush1.msra.mxu0 0.0
  %576 = vmatprep.subr.mxu0 0.0
  %577 = vmatpush1.msra.mxu0 0.0
  %578 = vmatprep.subr.mxu0 0.0
  %579 = vmatpush1.msra.mxu0 0.0
  %580 = vmatprep.subr.mxu0 0.0
  %581 = vmatpush1.msra.mxu0 0.0
  %582 = vmatprep.subr.mxu0 0.0
  %583 = vmatpush1.msra.mxu0 0.0
  %584 = vmatprep.mubr.f32.mxu0 0.0
  %585 = vmatmul.mubr.f32.gmra.mrb[0].mxu0 %v506
  %v586 = vpop.f32.mrb[0].mxu0
  %v587 = vadd.f32 0.0, %v586
  %v588 = vpop.f32.mrb[0].mxu0
  %589 = vdwg.mxu0
  %v590 = vmul.f32 %v587, 0.03125
  %591 = vmatprep.subr.mxu0 0.0
  %592 = vmatpush1.msra.mxu0 %v30
  %593 = vmatprep.subr.mxu0 0.0
  %594 = vmatpush1.msra.mxu0 %v31
  %595 = vmatprep.subr.mxu0 0.0
  %596 = vmatpush1.msra.mxu0 %v32
  %597 = vmatprep.subr.mxu0 0.0
  %598 = vmatpush1.msra.mxu0 %v33
  %599 = vmatprep.subr.mxu0 0.0
  %600 = vmatpush1.msra.mxu0 %v34
  %601 = vmatprep.subr.mxu0 0.0
  %602 = vmatpush1.msra.mxu0 %v35
  %603 = vmatprep.subr.mxu0 0.0
  %604 = vmatpush1.msra.mxu0 %v36
  %605 = vmatprep.subr.mxu0 0.0
  %606 = vmatpush1.msra.mxu0 %v37
  %607 = vmatprep.subr.mxu0 0.0
  %608 = vmatpush1.msra.mxu0 %v38
  %609 = vmatprep.subr.mxu0 0.0
  %610 = vmatpush1.msra.mxu0 %v39
  %611 = vmatprep.subr.mxu0 0.0
  %612 = vmatpush1.msra.mxu0 %v40
  %613 = vmatprep.subr.mxu0 0.0
  %614 = vmatpush1.msra.mxu0 %v41
  %615 = vmatprep.subr.mxu0 0.0
  %616 = vmatpush1.msra.mxu0 %v42
  %617 = vmatprep.subr.mxu0 0.0
  %618 = vmatpush1.msra.mxu0 %v43
  %619 = vmatprep.subr.mxu0 0.0
  %620 = vmatpush1.msra.mxu0 %v44
  %621 = vmatprep.subr.mxu0 0.0
  %622 = vmatpush1.msra.mxu0 %v45
  %623 = vmatprep.subr.mxu0 0.0
  %624 = vmatpush1.msra.mxu0 0.0
  %625 = vmatprep.subr.mxu0 0.0
  %626 = vmatpush1.msra.mxu0 0.0
  %627 = vmatprep.subr.mxu0 0.0
  %628 = vmatpush1.msra.mxu0 0.0
  %629 = vmatprep.subr.mxu0 0.0
  %630 = vmatpush1.msra.mxu0 0.0
  %631 = vmatprep.subr.mxu0 0.0
  %632 = vmatpush1.msra.mxu0 0.0
  %633 = vmatprep.subr.mxu0 0.0
  %634 = vmatpush1.msra.mxu0 0.0
  %635 = vmatprep.subr.mxu0 0.0
  %636 = vmatpush1.msra.mxu0 0.0
  %637 = vmatprep.subr.mxu0 0.0
  %638 = vmatpush1.msra.mxu0 0.0
  %639 = vmatprep.subr.mxu0 0.0
  %640 = vmatpush1.msra.mxu0 0.0
  %641 = vmatprep.subr.mxu0 0.0
  %642 = vmatpush1.msra.mxu0 0.0
  %643 = vmatprep.subr.mxu0 0.0
  %644 = vmatpush1.msra.mxu0 0.0
  %645 = vmatprep.subr.mxu0 0.0
  %646 = vmatpush1.msra.mxu0 0.0
  %647 = vmatprep.subr.mxu0 0.0
  %648 = vmatpush1.msra.mxu0 0.0
  %649 = vmatprep.subr.mxu0 0.0
  %650 = vmatpush1.msra.mxu0 0.0
  %651 = vmatprep.subr.mxu0 0.0
  %652 = vmatpush1.msra.mxu0 0.0
  %653 = vmatprep.subr.mxu0 0.0
  %654 = vmatpush1.msra.mxu0 0.0
  %655 = vmatprep.mubr.f32.mxu0 0.0
  %656 = vmatmul.mubr.f32.gmra.mrb[0].mxu0 %v519
  %v657 = vpop.f32.mrb[0].mxu0
  %v658 = vadd.f32 0.0, %v657
  %v659 = vpop.f32.mrb[0].mxu0
  %660 = vdwg.mxu0
  %v661 = vmul.f32 %v658, 0.03125
  %v662 = vmul.f32 %v590, %v590
  %v663 = vsub.f32 %v661, %v662
  %v664 = vadd.f32 %v663, 1e-05
  %v665 = vrsqrt.pop %v664
  %v666 = vmul.f32 %v126, %v665
  %v668 = vlaneseq
  %v669 = vshrl.u32 %v668, 7
  %v670 = vsub.s32 0, %v669
  %v671 = vrot.slane %v666, %v670
  %v673 = vmul.f32 %v494, %v671
  %v674 = vmul.f32 %v495, %v671
  %v675 = vmul.f32 %v496, %v671
  %v676 = vmul.f32 %v497, %v671
  %v677 = vmul.f32 %v590, %v666
  %v678 = vsub.f32 %v127, %v677
  %v680 = vlaneseq
  %v681 = vshrl.u32 %v680, 7
  %v682 = vsub.s32 0, %v681
  %v683 = vrot.slane %v678, %v682
  %v685 = vadd.f32 %v673, %v683
  %v686 = vadd.f32 %v674, %v683
  %v687 = vadd.f32 %v675, %v683
  %v688 = vadd.f32 %v676, %v683
  %v689 = vmax.f32 %v685, 0.0
  %v690 = vmax.f32 %v686, 0.0
  %v691 = vmax.f32 %v687, 0.0
  %v692 = vmax.f32 %v688, 0.0
  %vm693 = vcmask 1040384
  %vm694 = vmand %vm693, %vm47
  %v695 = vld [vmem:[#allocation3] sm:$0x1]
  %v696 = vsel %vm694, 0, %v695
  %697 = vst [vmem:[#allocation3] sm:$0x1] %v696
  %v698 = vld [vmem:[#allocation3 + $0xc] sm:$0x1]
  %v699 = vsel %vm694, 0, %v698
  %700 = vst [vmem:[#allocation3 + $0xc] sm:$0x1] %v699
  %vm701 = vmand %vm693, %vm55
  %v702 = vld [vmem:[#allocation3 + $0x8] sm:$0x1]
  %v703 = vsel %vm701, 0, %v702
  %704 = vst [vmem:[#allocation3 + $0x8] sm:$0x1] %v703
  %v705 = vld [vmem:[#allocation3 + $0x14] sm:$0x1]
  %v706 = vsel %vm701, 0, %v705
  %707 = vst [vmem:[#allocation3 + $0x14] sm:$0x1] %v706
  %v708 = vpack.c.bf16 %v690, %v689
  %v709 = vpack.c.bf16 %v692, %v691
  %v712 = vunpack.c.l.b16 %v708
  %v713 = vunpack.c.h.b16 %v708
  %v714 = vunpack.c.l.b16 %v709
  %v715 = vunpack.c.h.b16 %v709
  %v716 = vpack.c.b16 %v712, %v712
  %v717 = vpack.c.b16 %v713, %v713
  %v718 = vpack.c.b16 %v714, %v714
  %v719 = vpack.c.b16 %v715, %v715
  %v721 = vshrl.u32 %v716, 16
  %v723 = vrot.slane %v721, 7
  %v724 = vshll.u32 %v716, 16
  %v726 = vor.u32 %v723, %v724
  %v727 = vrot.slane %v723, 4
  %v729 = vshrl.u32 %v717, 16
  %v731 = vrot.slane %v729, 7
  %v732 = vshll.u32 %v717, 16
  %v734 = vor.u32 %v731, %v732
  %v735 = vsel %vm68, %v727, %v734
  %v736 = vrot.slane %v731, 4
  %v738 = vshrl.u32 %v718, 16
  %v740 = vrot.slane %v738, 7
  %v741 = vshll.u32 %v718, 16
  %v743 = vor.u32 %v740, %v741
  %v744 = vrot.slane %v740, 4
  %v746 = vshrl.u32 %v719, 16
  %v748 = vrot.slane %v746, 7
  %v749 = vshll.u32 %v719, 16
  %v751 = vor.u32 %v748, %v749
  %v752 = vsel %vm68, %v744, %v751
  %v753 = vrot.slane %v748, 4
  %vm760 = vcmask 1043456
  %vm761 = vmand %vm760, %vm55
  %v762 = vld [vmem:[#allocation3] sm:$0xf]
  %v763 = vsel %vm761, %v726, %v762
  %764 = vst [vmem:[#allocation3] sm:$0xf] %v763
  %765 = vst [vmem:[#allocation3 + $0x4] sm:$0xf] %v735
  %v766 = vld [vmem:[#allocation3 + $0x8] sm:$0x1]
  %v767 = vsel %vm694, %v736, %v766
  %768 = vst [vmem:[#allocation3 + $0x8] sm:$0x1] %v767
  %v769 = vld [vmem:[#allocation3 + $0xc] sm:$0xf]
  %v770 = vsel %vm761, %v743, %v769
  %771 = vst [vmem:[#allocation3 + $0xc] sm:$0xf] %v770
  %772 = vst [vmem:[#allocation3 + $0x10] sm:$0xf] %v752
  %v773 = vld [vmem:[#allocation3 + $0x14] sm:$0x1]
  %v774 = vsel %vm694, %v753, %v773
  %775 = vst [vmem:[#allocation3 + $0x14] sm:$0x1] %v774
  %v776 = vld [vmem:[%s5] sm:$0x1]
  %v777 = vld [vmem:[%s6] sm:$0x1]
  %v778 = vld [vmem:[#allocation3] sm:$0xf]
  %v779 = vld [vmem:[#allocation3 + $0x4] sm:$0xf]
  %v780 = vld [vmem:[#allocation3 + $0xc] sm:$0xf]
  %v781 = vld [vmem:[#allocation3 + $0x10] sm:$0xf]
  %v782 = vld [vmem:[%s4] sm:$0xf]
  %v783 = vld [vmem:[%s4 + $0x4] sm:$0xf]
  %v784 = vld [vmem:[%s4 + $0x8] sm:$0xf]
  %v785 = vld [vmem:[%s4 + $0xc] sm:$0xf]
  %v786 = vld [vmem:[%s4 + $0x10] sm:$0xf]
  %v787 = vld [vmem:[%s4 + $0x14] sm:$0xf]
  %v788 = vld [vmem:[%s4 + $0x18] sm:$0xf]
  %v789 = vld [vmem:[%s4 + $0x1c] sm:$0xf]
  %v790 = vld [vmem:[%s4 + $0x20] sm:$0xf]
  %v791 = vld [vmem:[%s4 + $0x24] sm:$0xf]
  %v792 = vld [vmem:[%s4 + $0x28] sm:$0xf]
  %v793 = vld [vmem:[%s4 + $0x2c] sm:$0xf]
  %v794 = vld [vmem:[%s4 + $0x30] sm:$0xf]
  %v795 = vld [vmem:[%s4 + $0x34] sm:$0xf]
  %v796 = vld [vmem:[%s4 + $0x38] sm:$0xf]
  %v797 = vld [vmem:[%s4 + $0x3c] sm:$0xf]
  %v798 = vld [vmem:[#allocation3 + $0x8] sm:$0x1]
  %v799 = vld [vmem:[#allocation3 + $0x14] sm:$0x1]
  %v801 = vshrl.u32 %v778, 16
  %v803 = vrot.slane %v801, 4
  %v804 = vshll.u32 %v778, 16
  %v806 = vrot.slane %v804, 5
  %v807 = vor.u32 %v803, %v806
  %v808 = vrot.slane %v807, 4
  %v810 = vshll.u32 %v779, 16
  %v812 = vrot.slane %v810, 5
  %v813 = vsel %vm144, %v808, %v812
  %v814 = vshrl.u32 %v779, 16
  %v816 = vrot.slane %v814, 4
  %v817 = vor.u32 %v816, %v812
  %v818 = vrot.slane %v817, 4
  %v820 = vshll.u32 %v798, 16
  %v822 = vrot.slane %v820, 5
  %v823 = vsel %vm144, %v818, %v822
  %v825 = vshrl.u32 %v780, 16
  %v827 = vrot.slane %v825, 4
  %v828 = vshll.u32 %v780, 16
  %v830 = vrot.slane %v828, 5
  %v831 = vor.u32 %v827, %v830
  %v832 = vrot.slane %v831, 4
  %v834 = vshll.u32 %v781, 16
  %v836 = vrot.slane %v834, 5
  %v837 = vsel %vm144, %v832, %v836
  %v838 = vshrl.u32 %v781, 16
  %v840 = vrot.slane %v838, 4
  %v841 = vor.u32 %v840, %v836
  %v842 = vrot.slane %v841, 4
  %v844 = vshll.u32 %v799, 16
  %v846 = vrot.slane %v844, 5
  %v847 = vsel %vm144, %v842, %v846
  %s848 = scalar_lea.vmem %s4, 64
  %v849 = vld [vmem:[%s848] sm:$0xf]
  %v850 = vld [vmem:[%s848 + $0x4] sm:$0xf]
  %v851 = vld [vmem:[%s848 + $0x8] sm:$0xf]
  %v852 = vld [vmem:[%s848 + $0xc] sm:$0xf]
  %v853 = vld [vmem:[%s848 + $0x10] sm:$0xf]
  %v854 = vld [vmem:[%s848 + $0x14] sm:$0xf]
  %v855 = vld [vmem:[%s848 + $0x18] sm:$0xf]
  %v856 = vld [vmem:[%s848 + $0x1c] sm:$0xf]
  %v857 = vld [vmem:[%s848 + $0x20] sm:$0xf]
  %v858 = vld [vmem:[%s848 + $0x24] sm:$0xf]
  %v859 = vld [vmem:[%s848 + $0x28] sm:$0xf]
  %v860 = vld [vmem:[%s848 + $0x2c] sm:$0xf]
  %v861 = vld [vmem:[%s848 + $0x30] sm:$0xf]
  %v862 = vld [vmem:[%s848 + $0x34] sm:$0xf]
  %v863 = vld [vmem:[%s848 + $0x38] sm:$0xf]
  %v864 = vld [vmem:[%s848 + $0x3c] sm:$0xf]
  %v865 = vunpack.c.l.b16 %v813
  %v866 = vunpack.c.l.b16 %v823
  %v867 = vunpack.c.l.b16 %v837
  %v868 = vunpack.c.l.b16 %v847
  %v869 = vpack.c.b16 %v866, %v865
  %v870 = vpack.c.b16 %v868, %v867
  %v889 = vunpack.c.l.b16 %v849
  %v890 = vunpack.c.l.b16 %v850
  %v891 = vunpack.c.l.b16 %v851
  %v892 = vunpack.c.l.b16 %v852
  %v893 = vunpack.c.l.b16 %v853
  %v894 = vunpack.c.l.b16 %v854
  %v895 = vunpack.c.l.b16 %v855
  %v896 = vunpack.c.l.b16 %v856
  %v897 = vunpack.c.l.b16 %v857
  %v898 = vunpack.c.l.b16 %v858
  %v899 = vunpack.c.l.b16 %v859
  %v900 = vunpack.c.l.b16 %v860
  %v901 = vunpack.c.l.b16 %v861
  %v902 = vunpack.c.l.b16 %v862
  %v903 = vunpack.c.l.b16 %v863
  %v904 = vunpack.c.l.b16 %v864
  %v905 = vpack.c.b16 %v890, %v889
  %v906 = vpack.c.b16 %v892, %v891
  %v907 = vpack.c.b16 %v894, %v893
  %v908 = vpack.c.b16 %v896, %v895
  %v909 = vpack.c.b16 %v898, %v897
  %v910 = vpack.c.b16 %v900, %v899
  %v911 = vpack.c.b16 %v902, %v901
  %v912 = vpack.c.b16 %v904, %v903
  %921 = vmatprep.subr.bf16.mxu0 0
  %922 = vmatpush1.bf16.msra.mxu0 %v905
  %923 = vmatprep.subr.bf16.mxu0 0
  %924 = vmatpush1.bf16.msra.mxu0 %v906
  %925 = vmatprep.subr.bf16.mxu0 0
  %926 = vmatpush1.bf16.msra.mxu0 %v907
  %927 = vmatprep.subr.bf16.mxu0 0
  %928 = vmatpush1.bf16.msra.mxu0 %v908
  %929 = vmatprep.subr.bf16.mxu0 0
  %930 = vmatpush1.bf16.msra.mxu0 %v909
  %931 = vmatprep.subr.bf16.mxu0 0
  %932 = vmatpush1.bf16.msra.mxu0 %v910
  %933 = vmatprep.subr.bf16.mxu0 0
  %934 = vmatpush1.bf16.msra.mxu0 %v911
  %935 = vmatprep.subr.bf16.mxu0 0
  %936 = vmatpush1.bf16.msra.mxu0 %v912
  %937 = vmatprep.subr.bf16.mxu0 0
  %938 = vmatpush1.bf16.msra.mxu0 0
  %939 = vmatprep.subr.bf16.mxu0 0
  %940 = vmatpush1.bf16.msra.mxu0 0
  %941 = vmatprep.subr.bf16.mxu0 0
  %942 = vmatpush1.bf16.msra.mxu0 0
  %943 = vmatprep.subr.bf16.mxu0 0
  %944 = vmatpush1.bf16.msra.mxu0 0
  %945 = vmatprep.subr.bf16.mxu0 0
  %946 = vmatpush1.bf16.msra.mxu0 0
  %947 = vmatprep.subr.bf16.mxu0 0
  %948 = vmatpush1.bf16.msra.mxu0 0
  %949 = vmatprep.subr.bf16.mxu0 0
  %950 = vmatpush1.bf16.msra.mxu0 0
  %951 = vmatprep.subr.bf16.mxu0 0
  %952 = vmatpush1.bf16.msra.mxu0 0
  %953 = vmatprep.mubr.bf16.mxu0 0
  %954 = vmatmul.mubr.bf16.gmra.mrb[0].mxu0 %v869
  %v955 = vpop.f32.mrb[0].mxu0
  %v956 = vadd.f32 0.0, %v955
  %v957 = vpop.f32.mrb[0].mxu0
  %v958 = vpop.f32.mrb[0].mxu0
  %v959 = vadd.f32 0.0, %v958
  %v960 = vpop.f32.mrb[0].mxu0
  %961 = vmatprep.mubr.bf16.mxu0 0
  %962 = vmatmul.mubr.bf16.gmra.mrb[0].mxu0 %v870
  %v963 = vpop.f32.mrb[0].mxu0
  %v964 = vadd.f32 0.0, %v963
  %v965 = vpop.f32.mrb[0].mxu0
  %v966 = vpop.f32.mrb[0].mxu0
  %v967 = vadd.f32 0.0, %v966
  %v968 = vpop.f32.mrb[0].mxu0
  %969 = vdwg.mxu0
  %v974 = vunpack.c.l.b16 %v778
  %v975 = vunpack.c.l.b16 %v779
  %v976 = vunpack.c.l.b16 %v780
  %v977 = vunpack.c.l.b16 %v781
  %v978 = vpack.c.b16 %v975, %v974
  %v979 = vpack.c.b16 %v977, %v976
  %v998 = vunpack.c.l.b16 %v782
  %v999 = vunpack.c.l.b16 %v783
  %v1000 = vunpack.c.l.b16 %v784
  %v1001 = vunpack.c.l.b16 %v785
  %v1002 = vunpack.c.l.b16 %v786
  %v1003 = vunpack.c.l.b16 %v787
  %v1004 = vunpack.c.l.b16 %v788
  %v1005 = vunpack.c.l.b16 %v789
  %v1006 = vunpack.c.l.b16 %v790
  %v1007 = vunpack.c.l.b16 %v791
  %v1008 = vunpack.c.l.b16 %v792
  %v1009 = vunpack.c.l.b16 %v793
  %v1010 = vunpack.c.l.b16 %v794
  %v1011 = vunpack.c.l.b16 %v795
  %v1012 = vunpack.c.l.b16 %v796
  %v1013 = vunpack.c.l.b16 %v797
  %v1014 = vpack.c.b16 %v999, %v998
  %v1015 = vpack.c.b16 %v1001, %v1000
  %v1016 = vpack.c.b16 %v1003, %v1002
  %v1017 = vpack.c.b16 %v1005, %v1004
  %v1018 = vpack.c.b16 %v1007, %v1006
  %v1019 = vpack.c.b16 %v1009, %v1008
  %v1020 = vpack.c.b16 %v1011, %v1010
  %v1021 = vpack.c.b16 %v1013, %v1012
  %1030 = vmatprep.subr.bf16.mxu0 0
  %1031 = vmatpush1.bf16.msra.mxu0 %v1014
  %1032 = vmatprep.subr.bf16.mxu0 0
  %1033 = vmatpush1.bf16.msra.mxu0 %v1015
  %1034 = vmatprep.subr.bf16.mxu0 0
  %1035 = vmatpush1.bf16.msra.mxu0 %v1016
  %1036 = vmatprep.subr.bf16.mxu0 0
  %1037 = vmatpush1.bf16.msra.mxu0 %v1017
  %1038 = vmatprep.subr.bf16.mxu0 0
  %1039 = vmatpush1.bf16.msra.mxu0 %v1018
  %1040 = vmatprep.subr.bf16.mxu0 0
  %1041 = vmatpush1.bf16.msra.mxu0 %v1019
  %1042 = vmatprep.subr.bf16.mxu0 0
  %1043 = vmatpush1.bf16.msra.mxu0 %v1020
  %1044 = vmatprep.subr.bf16.mxu0 0
  %1045 = vmatpush1.bf16.msra.mxu0 %v1021
  %1046 = vmatprep.subr.bf16.mxu0 0
  %1047 = vmatpush1.bf16.msra.mxu0 0
  %1048 = vmatprep.subr.bf16.mxu0 0
  %1049 = vmatpush1.bf16.msra.mxu0 0
  %1050 = vmatprep.subr.bf16.mxu0 0
  %1051 = vmatpush1.bf16.msra.mxu0 0
  %1052 = vmatprep.subr.bf16.mxu0 0
  %1053 = vmatpush1.bf16.msra.mxu0 0
  %1054 = vmatprep.subr.bf16.mxu0 0
  %1055 = vmatpush1.bf16.msra.mxu0 0
  %1056 = vmatprep.subr.bf16.mxu0 0
  %1057 = vmatpush1.bf16.msra.mxu0 0
  %1058 = vmatprep.subr.bf16.mxu0 0
  %1059 = vmatpush1.bf16.msra.mxu0 0
  %1060 = vmatprep.subr.bf16.mxu0 0
  %1061 = vmatpush1.bf16.msra.mxu0 0
  %1062 = vmatprep.mubr.bf16.mxu0 0
  %1063 = vmatmul.mubr.bf16.gmra.mrb[0].mxu0 %v978
  %v1064 = vpop.f32.mrb[0].mxu0
  %v1065 = vadd.f32 %v956, %v1064
  %v1066 = vpop.f32.mrb[0].mxu0
  %v1067 = vpop.f32.mrb[0].mxu0
  %v1068 = vadd.f32 %v959, %v1067
  %v1069 = vpop.f32.mrb[0].mxu0
  %1070 = vmatprep.mubr.bf16.mxu0 0
  %1071 = vmatmul.mubr.bf16.gmra.mrb[0].mxu0 %v979
  %v1072 = vpop.f32.mrb[0].mxu0
  %v1073 = vadd.f32 %v964, %v1072
  %v1074 = vpop.f32.mrb[0].mxu0
  %v1075 = vpop.f32.mrb[0].mxu0
  %v1076 = vadd.f32 %v967, %v1075
  %v1077 = vpop.f32.mrb[0].mxu0
  %1078 = vdwg.mxu0
  %v1079 = vld [vmem:[#allocation3] sm:$0xe]
  %v1080 = vld [vmem:[#allocation3 + $0xc] sm:$0xe]
  %v1085 = vrot.slane %v1079, 5
  %v1086 = vrot.slane %v1085, 4
  %v1087 = vrot.slane %v779, 5
  %v1088 = vsel %vm385, %v1086, %v1087
  %v1089 = vrot.slane %v1087, 4
  %v1090 = vrot.slane %v798, 5
  %v1091 = vsel %vm385, %v1089, %v1090
  %v1092 = vrot.slane %v1080, 5
  %v1093 = vrot.slane %v1092, 4
  %v1094 = vrot.slane %v781, 5
  %v1095 = vsel %vm385, %v1093, %v1094
  %v1096 = vrot.slane %v1094, 4
  %v1097 = vrot.slane %v799, 5
  %v1098 = vsel %vm385, %v1096, %v1097
  %s1099 = scalar_lea.vmem %s4, 128
  %v1100 = vld [vmem:[%s1099] sm:$0xf]
  %v1101 = vld [vmem:[%s1099 + $0x4] sm:$0xf]
  %v1102 = vld [vmem:[%s1099 + $0x8] sm:$0xf]
  %v1103 = vld [vmem:[%s1099 + $0xc] sm:$0xf]
  %v1104 = vld [vmem:[%s1099 + $0x10] sm:$0xf]
  %v1105 = vld [vmem:[%s1099 + $0x14] sm:$0xf]
  %v1106 = vld [vmem:[%s1099 + $0x18] sm:$0xf]
  %v1107 = vld [vmem:[%s1099 + $0x1c] sm:$0xf]
  %v1108 = vld [vmem:[%s1099 + $0x20] sm:$0xf]
  %v1109 = vld [vmem:[%s1099 + $0x24] sm:$0xf]
  %v1110 = vld [vmem:[%s1099 + $0x28] sm:$0xf]
  %v1111 = vld [vmem:[%s1099 + $0x2c] sm:$0xf]
  %v1112 = vld [vmem:[%s1099 + $0x30] sm:$0xf]
  %v1113 = vld [vmem:[%s1099 + $0x34] sm:$0xf]
  %v1114 = vld [vmem:[%s1099 + $0x38] sm:$0xf]
  %v1115 = vld [vmem:[%s1099 + $0x3c] sm:$0xf]
  %v1116 = vunpack.c.l.b16 %v1088
  %v1117 = vunpack.c.l.b16 %v1091
  %v1118 = vunpack.c.l.b16 %v1095
  %v1119 = vunpack.c.l.b16 %v1098
  %v1120 = vpack.c.b16 %v1117, %v1116
  %v1121 = vpack.c.b16 %v1119, %v1118
  %v1140 = vunpack.c.l.b16 %v1100
  %v1141 = vunpack.c.l.b16 %v1101
  %v1142 = vunpack.c.l.b16 %v1102
  %v1143 = vunpack.c.l.b16 %v1103
  %v1144 = vunpack.c.l.b16 %v1104
  %v1145 = vunpack.c.l.b16 %v1105
  %v1146 = vunpack.c.l.b16 %v1106
  %v1147 = vunpack.c.l.b16 %v1107
  %v1148 = vunpack.c.l.b16 %v1108
  %v1149 = vunpack.c.l.b16 %v1109
  %v1150 = vunpack.c.l.b16 %v1110
  %v1151 = vunpack.c.l.b16 %v1111
  %v1152 = vunpack.c.l.b16 %v1112
  %v1153 = vunpack.c.l.b16 %v1113
  %v1154 = vunpack.c.l.b16 %v1114
  %v1155 = vunpack.c.l.b16 %v1115
  %v1156 = vpack.c.b16 %v1141, %v1140
  %v1157 = vpack.c.b16 %v1143, %v1142
  %v1158 = vpack.c.b16 %v1145, %v1144
  %v1159 = vpack.c.b16 %v1147, %v1146
  %v1160 = vpack.c.b16 %v1149, %v1148
  %v1161 = vpack.c.b16 %v1151, %v1150
  %v1162 = vpack.c.b16 %v1153, %v1152
  %v1163 = vpack.c.b16 %v1155, %v1154
  %1172 = vmatprep.subr.bf16.mxu0 0
  %1173 = vmatpush1.bf16.msra.mxu0 %v1156
  %1174 = vmatprep.subr.bf16.mxu0 0
  %1175 = vmatpush1.bf16.msra.mxu0 %v1157
  %1176 = vmatprep.subr.bf16.mxu0 0
  %1177 = vmatpush1.bf16.msra.mxu0 %v1158
  %1178 = vmatprep.subr.bf16.mxu0 0
  %1179 = vmatpush1.bf16.msra.mxu0 %v1159
  %1180 = vmatprep.subr.bf16.mxu0 0
  %1181 = vmatpush1.bf16.msra.mxu0 %v1160
  %1182 = vmatprep.subr.bf16.mxu0 0
  %1183 = vmatpush1.bf16.msra.mxu0 %v1161
  %1184 = vmatprep.subr.bf16.mxu0 0
  %1185 = vmatpush1.bf16.msra.mxu0 %v1162
  %1186 = vmatprep.subr.bf16.mxu0 0
  %1187 = vmatpush1.bf16.msra.mxu0 %v1163
  %1188 = vmatprep.subr.bf16.mxu0 0
  %1189 = vmatpush1.bf16.msra.mxu0 0
  %1190 = vmatprep.subr.bf16.mxu0 0
  %1191 = vmatpush1.bf16.msra.mxu0 0
  %1192 = vmatprep.subr.bf16.mxu0 0
  %1193 = vmatpush1.bf16.msra.mxu0 0
  %1194 = vmatprep.subr.bf16.mxu0 0
  %1195 = vmatpush1.bf16.msra.mxu0 0
  %1196 = vmatprep.subr.bf16.mxu0 0
  %1197 = vmatpush1.bf16.msra.mxu0 0
  %1198 = vmatprep.subr.bf16.mxu0 0
  %1199 = vmatpush1.bf16.msra.mxu0 0
  %1200 = vmatprep.subr.bf16.mxu0 0
  %1201 = vmatpush1.bf16.msra.mxu0 0
  %1202 = vmatprep.subr.bf16.mxu0 0
  %1203 = vmatpush1.bf16.msra.mxu0 0
  %1204 = vmatprep.mubr.bf16.mxu0 0
  %1205 = vmatmul.mubr.bf16.gmra.mrb[0].mxu0 %v1120
  %v1206 = vpop.f32.mrb[0].mxu0
  %v1207 = vadd.f32 0.0, %v1206
  %v1208 = vpop.f32.mrb[0].mxu0
  %v1209 = vpop.f32.mrb[0].mxu0
  %v1210 = vadd.f32 0.0, %v1209
  %v1211 = vpop.f32.mrb[0].mxu0
  %1212 = vmatprep.mubr.bf16.mxu0 0
  %1213 = vmatmul.mubr.bf16.gmra.mrb[0].mxu0 %v1121
  %v1214 = vpop.f32.mrb[0].mxu0
  %v1215 = vadd.f32 0.0, %v1214
  %v1216 = vpop.f32.mrb[0].mxu0
  %v1217 = vpop.f32.mrb[0].mxu0
  %v1218 = vadd.f32 0.0, %v1217
  %v1219 = vpop.f32.mrb[0].mxu0
  %1220 = vdwg.mxu0
  %v1221 = vadd.f32 %v1065, %v1207
  %v1222 = vadd.f32 %v1068, %v1210
  %v1223 = vadd.f32 %v1073, %v1215
  %v1224 = vadd.f32 %v1076, %v1218
  %v1225 = vadd.f32 %v1221, %v1222
  %v1226 = vadd.f32 %v1225, %v1223
  %v1227 = vadd.f32 %v1226, %v1224
  %v1228 = vrot.slane %v1227, 4
  %v1229 = vadd.f32 %v1227, %v1228
  %v1230 = vrot.slane %v1229, 2
  %v1231 = vadd.f32 %v1229, %v1230
  %v1232 = vrot.slane %v1231, 1
  %v1233 = vadd.f32 %v1231, %v1232
  %v1234 = vmul.f32 %v1221, %v1221
  %v1235 = vmul.f32 %v1222, %v1222
  %v1236 = vmul.f32 %v1223, %v1223
  %v1237 = vmul.f32 %v1224, %v1224
  %v1238 = vadd.f32 %v1234, %v1235
  %v1239 = vadd.f32 %v1238, %v1236
  %v1240 = vadd.f32 %v1239, %v1237
  %v1241 = vrot.slane %v1240, 4
  %v1242 = vadd.f32 %v1240, %v1241
  %v1243 = vrot.slane %v1242, 2
  %v1244 = vadd.f32 %v1242, %v1243
  %v1245 = vrot.slane %v1244, 1
  %v1246 = vadd.f32 %v1244, %v1245
  %1247 = vmatprep.subr.mxu0 0.0
  %1248 = vmatpush1.msra.mxu0 %v30
  %1249 = vmatprep.subr.mxu0 0.0
  %1250 = vmatpush1.msra.mxu0 %v31
  %1251 = vmatprep.subr.mxu0 0.0
  %1252 = vmatpush1.msra.mxu0 %v32
  %1253 = vmatprep.subr.mxu0 0.0
  %1254 = vmatpush1.msra.mxu0 %v33
  %1255 = vmatprep.subr.mxu0 0.0
  %1256 = vmatpush1.msra.mxu0 %v34
  %1257 = vmatprep.subr.mxu0 0.0
  %1258 = vmatpush1.msra.mxu0 %v35
  %1259 = vmatprep.subr.mxu0 0.0
  %1260 = vmatpush1.msra.mxu0 %v36
  %1261 = vmatprep.subr.mxu0 0.0
  %1262 = vmatpush1.msra.mxu0 %v37
  %1263 = vmatprep.subr.mxu0 0.0
  %1264 = vmatpush1.msra.mxu0 %v38
  %1265 = vmatprep.subr.mxu0 0.0
  %1266 = vmatpush1.msra.mxu0 %v39
  %1267 = vmatprep.subr.mxu0 0.0
  %1268 = vmatpush1.msra.mxu0 %v40
  %1269 = vmatprep.subr.mxu0 0.0
  %1270 = vmatpush1.msra.mxu0 %v41
  %1271 = vmatprep.subr.mxu0 0.0
  %1272 = vmatpush1.msra.mxu0 %v42
  %1273 = vmatprep.subr.mxu0 0.0
  %1274 = vmatpush1.msra.mxu0 %v43
  %1275 = vmatprep.subr.mxu0 0.0
  %1276 = vmatpush1.msra.mxu0 %v44
  %1277 = vmatprep.subr.mxu0 0.0
  %1278 = vmatpush1.msra.mxu0 %v45
  %1279 = vmatprep.subr.mxu0 0.0
  %1280 = vmatpush1.msra.mxu0 0.0
  %1281 = vmatprep.subr.mxu0 0.0
  %1282 = vmatpush1.msra.mxu0 0.0
  %1283 = vmatprep.subr.mxu0 0.0
  %1284 = vmatpush1.msra.mxu0 0.0
  %1285 = vmatprep.subr.mxu0 0.0
  %1286 = vmatpush1.msra.mxu0 0.0
  %1287 = vmatprep.subr.mxu0 0.0
  %1288 = vmatpush1.msra.mxu0 0.0
  %1289 = vmatprep.subr.mxu0 0.0
  %1290 = vmatpush1.msra.mxu0 0.0
  %1291 = vmatprep.subr.mxu0 0.0
  %1292 = vmatpush1.msra.mxu0 0.0
  %1293 = vmatprep.subr.mxu0 0.0
  %1294 = vmatpush1.msra.mxu0 0.0
  %1295 = vmatprep.subr.mxu0 0.0
  %1296 = vmatpush1.msra.mxu0 0.0
  %1297 = vmatprep.subr.mxu0 0.0
  %1298 = vmatpush1.msra.mxu0 0.0
  %1299 = vmatprep.subr.mxu0 0.0
  %1300 = vmatpush1.msra.mxu0 0.0
  %1301 = vmatprep.subr.mxu0 0.0
  %1302 = vmatpush1.msra.mxu0 0.0
  %1303 = vmatprep.subr.mxu0 0.0
  %1304 = vmatpush1.msra.mxu0 0.0
  %1305 = vmatprep.subr.mxu0 0.0
  %1306 = vmatpush1.msra.mxu0 0.0
  %1307 = vmatprep.subr.mxu0 0.0
  %1308 = vmatpush1.msra.mxu0 0.0
  %1309 = vmatprep.subr.mxu0 0.0
  %1310 = vmatpush1.msra.mxu0 0.0
  %1311 = vmatprep.mubr.f32.mxu0 0.0
  %1312 = vmatmul.mubr.f32.gmra.mrb[0].mxu0 %v1233
  %v1313 = vpop.f32.mrb[0].mxu0
  %v1314 = vadd.f32 0.0, %v1313
  %v1315 = vpop.f32.mrb[0].mxu0
  %1316 = vdwg.mxu0
  %v1317 = vmul.f32 %v1314, 0.03125
  %1318 = vmatprep.subr.mxu0 0.0
  %1319 = vmatpush1.msra.mxu0 %v30
  %1320 = vmatprep.subr.mxu0 0.0
  %1321 = vmatpush1.msra.mxu0 %v31
  %1322 = vmatprep.subr.mxu0 0.0
  %1323 = vmatpush1.msra.mxu0 %v32
  %1324 = vmatprep.subr.mxu0 0.0
  %1325 = vmatpush1.msra.mxu0 %v33
  %1326 = vmatprep.subr.mxu0 0.0
  %1327 = vmatpush1.msra.mxu0 %v34
  %1328 = vmatprep.subr.mxu0 0.0
  %1329 = vmatpush1.msra.mxu0 %v35
  %1330 = vmatprep.subr.mxu0 0.0
  %1331 = vmatpush1.msra.mxu0 %v36
  %1332 = vmatprep.subr.mxu0 0.0
  %1333 = vmatpush1.msra.mxu0 %v37
  %1334 = vmatprep.subr.mxu0 0.0
  %1335 = vmatpush1.msra.mxu0 %v38
  %1336 = vmatprep.subr.mxu0 0.0
  %1337 = vmatpush1.msra.mxu0 %v39
  %1338 = vmatprep.subr.mxu0 0.0
  %1339 = vmatpush1.msra.mxu0 %v40
  %1340 = vmatprep.subr.mxu0 0.0
  %1341 = vmatpush1.msra.mxu0 %v41
  %1342 = vmatprep.subr.mxu0 0.0
  %1343 = vmatpush1.msra.mxu0 %v42
  %1344 = vmatprep.subr.mxu0 0.0
  %1345 = vmatpush1.msra.mxu0 %v43
  %1346 = vmatprep.subr.mxu0 0.0
  %1347 = vmatpush1.msra.mxu0 %v44
  %1348 = vmatprep.subr.mxu0 0.0
  %1349 = vmatpush1.msra.mxu0 %v45
  %1350 = vmatprep.subr.mxu0 0.0
  %1351 = vmatpush1.msra.mxu0 0.0
  %1352 = vmatprep.subr.mxu0 0.0
  %1353 = vmatpush1.msra.mxu0 0.0
  %1354 = vmatprep.subr.mxu0 0.0
  %1355 = vmatpush1.msra.mxu0 0.0
  %1356 = vmatprep.subr.mxu0 0.0
  %1357 = vmatpush1.msra.mxu0 0.0
  %1358 = vmatprep.subr.mxu0 0.0
  %1359 = vmatpush1.msra.mxu0 0.0
  %1360 = vmatprep.subr.mxu0 0.0
  %1361 = vmatpush1.msra.mxu0 0.0
  %1362 = vmatprep.subr.mxu0 0.0
  %1363 = vmatpush1.msra.mxu0 0.0
  %1364 = vmatprep.subr.mxu0 0.0
  %1365 = vmatpush1.msra.mxu0 0.0
  %1366 = vmatprep.subr.mxu0 0.0
  %1367 = vmatpush1.msra.mxu0 0.0
  %1368 = vmatprep.subr.mxu0 0.0
  %1369 = vmatpush1.msra.mxu0 0.0
  %1370 = vmatprep.subr.mxu0 0.0
  %1371 = vmatpush1.msra.mxu0 0.0
  %1372 = vmatprep.subr.mxu0 0.0
  %1373 = vmatpush1.msra.mxu0 0.0
  %1374 = vmatprep.subr.mxu0 0.0
  %1375 = vmatpush1.msra.mxu0 0.0
  %1376 = vmatprep.subr.mxu0 0.0
  %1377 = vmatpush1.msra.mxu0 0.0
  %1378 = vmatprep.subr.mxu0 0.0
  %1379 = vmatpush1.msra.mxu0 0.0
  %1380 = vmatprep.subr.mxu0 0.0
  %1381 = vmatpush1.msra.mxu0 0.0
  %1382 = vmatprep.mubr.f32.mxu0 0.0
  %1383 = vmatmul.mubr.f32.gmra.mrb[0].mxu0 %v1246
  %v1384 = vpop.f32.mrb[0].mxu0
  %v1385 = vadd.f32 0.0, %v1384
  %v1386 = vpop.f32.mrb[0].mxu0
  %1387 = vdwg.mxu0
  %v1388 = vmul.f32 %v1385, 0.03125
  %v1389 = vmul.f32 %v1317, %v1317
  %v1390 = vsub.f32 %v1388, %v1389
  %v1391 = vadd.f32 %v1390, 1e-05
  %v1392 = vrsqrt.pop %v1391
  %v1393 = vmul.f32 %v776, %v1392
  %v1395 = vlaneseq
  %v1396 = vshrl.u32 %v1395, 7
  %v1397 = vsub.s32 0, %v1396
  %v1398 = vrot.slane %v1393, %v1397
  %v1400 = vmul.f32 %v1221, %v1398
  %v1401 = vmul.f32 %v1222, %v1398
  %v1402 = vmul.f32 %v1223, %v1398
  %v1403 = vmul.f32 %v1224, %v1398
  %v1404 = vmul.f32 %v1317, %v1393
  %v1405 = vsub.f32 %v777, %v1404
  %v1407 = vlaneseq
  %v1408 = vshrl.u32 %v1407, 7
  %v1409 = vsub.s32 0, %v1408
  %v1410 = vrot.slane %v1405, %v1409
  %v1412 = vadd.f32 %v1400, %v1410
  %v1413 = vadd.f32 %v1401, %v1410
  %v1414 = vadd.f32 %v1402, %v1410
  %v1415 = vadd.f32 %v1403, %v1410
  %v1416 = vmax.f32 %v1412, 0.0
  %v1417 = vmax.f32 %v1413, 0.0
  %v1418 = vmax.f32 %v1414, 0.0
  %v1419 = vmax.f32 %v1415, 0.0
  %1420 = vst [vmem:[%s8] sm:$0xff] %v1416
  %1421 = vst [vmem:[%s8 + $0x8] sm:$0xff] %v1417
  %1422 = vst [vmem:[%s8 + $0x10] sm:$0xff] %v1418
  %1423 = vst [vmem:[%s8 + $0x18] sm:$0xff] %v1419
  // Predicated region
  $region34: #{double_nested_conv.1} parent=0 // pred_check
    _
  $region35: #{double_nested_conv.1} parent=0 // pred_check_branch
    %1425 = sbr.rel (0) target = $region37
  $region36: #{double_nested_conv.1} parent=0 // pred_region
    _
  $region37: #{double_nested_conv.1} parent=0 // pred_fallthru
    _
  // Predicated region
  $region38: #{double_nested_conv.1} parent=0 // pred_check
    _
  $region39: #{double_nested_conv.1} parent=0 // pred_check_branch
    %1427 = sbr.rel (0) target = $region41
  $region40: #{double_nested_conv.1} parent=0 // pred_region
    _
  $region41: #{double_nested_conv.1} parent=0 // pred_fallthru
    _

</llo_original>
